<compile_context>
chip_gen: v7x
topology: tpu7x:2x2x1
jax: 0.10.0
libtpu: 0.0.40
codegen_flags: <defaults>
</compile_context>

<pallas_src>
import functools
import math

import jax
import jax.numpy as jnp
from jax.experimental import pallas as pl
from jax.experimental.pallas import tpu as pltpu


# ----------------------------------------------------------------------------
# Helpers.
# ----------------------------------------------------------------------------
def _round_up(x, m):
    return (x + m - 1) // m * m


def _vmem_limit_bytes():
    """Generation-aware scoped-VMEM limit (None -> keep compiler default)."""
    try:
        cap = int(pltpu.get_tpu_info().vmem_capacity_bytes)
        return max(32 << 20, min(cap - (8 << 20), 100 << 20))
    except Exception:
        return None


def _pick_vocab_tile(v_pad, d_pad, m_rows, vmem_limit):
    """Largest 128-multiple vocab tile keeping the (double-buffered) W_U tile
    + logits tile + bias inside a fraction of the VMEM budget."""
    budget = (vmem_limit or (32 << 20)) // 3
    per_lane_bytes = 4 * (2 * d_pad + 2 * m_rows + 2)
    tile = (budget // per_lane_bytes) // 128 * 128
    tile = int(max(128, min(tile, v_pad)))
    while v_pad % tile:
        tile -= 128
    return tile


# ----------------------------------------------------------------------------
# Kernel 1: packed gated attention (all batches, all heads) + fused residual.
# ----------------------------------------------------------------------------
def attn_kernel(r_ref, rT_ref, mask_ref, wf_ref, bf_ref, wgk_ref, bgk_ref,
                wo_ref, out_ref, *, n_heads, d_head, d_gate, scale):
    r = r_ref[...]                                                 # (M, Dp) f32
    m_rows = r.shape[0]

    # Fused projection for all heads: [Q | K | V_normed | gate_Q].
    proj = jnp.dot(r, wf_ref[...],
                   preferred_element_type=jnp.float32) + bf_ref[...]      # (M, P)

    # Key-gate projection in transposed layout (heads on sublanes, positions
    # on lanes) so the d_gate==1 gate is a VPU broadcast outer product.
    kgT = jnp.dot(wgk_ref[...], rT_ref[...],
                  preferred_element_type=jnp.float32) + bgk_ref[...]      # (H*dg, M)

    mask_bias = mask_ref[...]                      # (M, M): 0 keep / -1e30 drop
    hd = n_heads * d_head

    # TODO(synk): for long sequences, replace the packed (M, M) score matrix
    # with a flash-style q-tile ("parallel") x kv-tile ("arbitrary") grid with
    # online softmax; the packed form is only used because M = B*S is tiny.
    acc = r                                        # fused residual add
    for h in range(n_heads):
        q = proj[:, h * d_head:(h + 1) * d_head]                          # (M, dh)
        k = proj[:, hd + h * d_head: hd + (h + 1) * d_head]               # (M, dh)
        v = proj[:, 2 * hd + h * d_head: 2 * hd + (h + 1) * d_head]       # (M, dh)
        qg = proj[:, 3 * hd + h * d_gate: 3 * hd + (h + 1) * d_gate]      # (M, dg)
        kg = kgT[h * d_gate:(h + 1) * d_gate, :]                          # (dg, M)

        # Scores + packed causal/batch mask + exact softmax (no k transpose).
        scores = jnp.einsum("qd,kd->qk", q, k,
                            preferred_element_type=jnp.float32) * scale
        scores = scores + mask_bias
        mx = jnp.max(scores, axis=-1, keepdims=True)
        e = jnp.exp(scores - mx)
        p = e / jnp.sum(e, axis=-1, keepdims=True)

        # Gate = clamp(q_gate . k_gate, 0, 1); d_gate == 1 -> VPU outer product.
        if d_gate == 1:
            gate = (jnp.broadcast_to(qg, (m_rows, m_rows)) *
                    jnp.broadcast_to(kg, (m_rows, m_rows)))
        else:
            gate = jnp.dot(qg, kg, preferred_element_type=jnp.float32)
        gate = jnp.clip(gate, 0.0, 1.0)

        z = jnp.dot(gate * p, v, preferred_element_type=jnp.float32)      # (M, dh)
        # Accumulate the per-head output projection directly (no lane concat).
        acc = acc + jnp.dot(z, wo_ref[h * d_head:(h + 1) * d_head, :],
                            preferred_element_type=jnp.float32)           # (M, Dp)

    out_ref[...] = acc.astype(out_ref.dtype)


# ----------------------------------------------------------------------------
# Kernel 2: unembed, activations resident, W_U streamed once over vocab tiles.
# ----------------------------------------------------------------------------
def unembed_kernel(x_ref, wu_ref, bu_ref, out_ref):
    out_ref[...] = (jnp.dot(x_ref[...], wu_ref[...],
                            preferred_element_type=jnp.float32)
                    + bu_ref[...]).astype(out_ref.dtype)


# ----------------------------------------------------------------------------
# Full ModifiedAttentionTransformer forward.
# ----------------------------------------------------------------------------
def modified_attention_transformer(tokens, params):
    B, S = tokens.shape
    D = params["W_E"].shape[1]
    V = params["W_U"].shape[1]
    H, _, d_head = params["W_Q"].shape
    d_gate = params["W_gate_Q"].shape[-1]
    assert d_gate == 1, "module spec fixes d_gate == 1"
    Dp, Vp = _round_up(D, 128), _round_up(V, 128)
    M = B * S
    vmem_limit = _vmem_limit_bytes()

    # ---- Embed (token gather): plain-JAX glue; pad d_model to lane width. --
    W_E_pad = jnp.pad(params["W_E"].astype(jnp.float32), ((0, 0), (0, Dp - D)))
    r_flat = jnp.take(W_E_pad, tokens.reshape(-1), axis=0)            # (M, Dp)
    rT = r_flat.T                                                     # (Dp, M)

    # ---- Weight prep hoisted out of the kernels (done once per call). -----
    eps = 1e-12
    wv = params["W_V"]
    wv_n = wv / jnp.maximum(jnp.sqrt(jnp.sum(wv * wv, axis=1, keepdims=True)), eps)
    wo = params["W_O"]
    wo_n = wo / jnp.maximum(jnp.sqrt(jnp.sum(wo * wo, axis=2, keepdims=True)), eps)

    def to_cols(w):                      # (H, D, x) -> (Dp, H*x), zero-padded rows
        cols = jnp.transpose(w, (1, 0, 2)).reshape(D, -1)
        return jnp.pad(cols, ((0, Dp - D), (0, 0)))

    W_fused = jnp.concatenate(
        [to_cols(params["W_Q"]), to_cols(params["W_K"]), to_cols(wv_n),
         to_cols(params["W_gate_Q"])], axis=1).astype(jnp.float32)    # (Dp, P)
    b_fused = jnp.concatenate(
        [params["b_Q"].reshape(-1), params["b_K"].reshape(-1),
         params["b_V"].reshape(-1), params["b_gate_Q"].reshape(-1)]
    ).reshape(1, -1).astype(jnp.float32)                              # (1, P)
    P = W_fused.shape[1]

    WgkT = jnp.pad(
        jnp.transpose(params["W_gate_K"], (0, 2, 1)).reshape(H * d_gate, D),
        ((0, 0), (0, Dp - D))).astype(jnp.float32)                    # (H*dg, Dp)
    bgk = params["b_gate_K"].reshape(H * d_gate, 1).astype(jnp.float32)
    W_O_all = jnp.pad(wo_n.reshape(H * d_head, D),
                      ((0, 0), (0, Dp - D))).astype(jnp.float32)      # (H*dh, Dp)

    # Packed-sequence additive mask: causal within each sequence, -1e30 across
    # sequences (exp underflows to exactly 0, so softmax stays per-sequence).
    pos = jnp.arange(M)
    keep = ((pos[:, None] // S) == (pos[None, :] // S)) & (pos[None, :] <= pos[:, None])
    mask_bias = jnp.where(keep, 0.0, -1e30).astype(jnp.float32)       # (M, M)

    # ---- Kernel 1: gated attention + fused residual, single grid step. ----
    attn = functools.partial(attn_kernel, n_heads=H, d_head=d_head,
                             d_gate=d_gate, scale=1.0 / math.sqrt(d_head))
    resid_post = pl.pallas_call(
        attn,
        out_shape=jax.ShapeDtypeStruct((M, Dp), jnp.float32),
        grid_spec=pltpu.PrefetchScalarGridSpec(
            num_scalar_prefetch=0,
            grid=(1,),
            in_specs=[
                pl.BlockSpec((M, Dp), lambda i: (0, 0)),              # r (packed batch)
                pl.BlockSpec((Dp, M), lambda i: (0, 0)),              # r^T (key-gate path)
                pl.BlockSpec((M, M), lambda i: (0, 0)),               # mask bias
                pl.BlockSpec((Dp, P), lambda i: (0, 0)),              # W_fused
                pl.BlockSpec((1, P), lambda i: (0, 0)),               # b_fused
                pl.BlockSpec((H * d_gate, Dp), lambda i: (0, 0)),     # W_gate_K^T
                pl.BlockSpec((H * d_gate, 1), lambda i: (0, 0)),      # b_gate_K
                pl.BlockSpec((H * d_head, Dp), lambda i: (0, 0)),     # W_O (normed)
            ],
            out_specs=pl.BlockSpec((M, Dp), lambda i: (0, 0)),
        ),
        compiler_params=pltpu.CompilerParams(
            dimension_semantics=("arbitrary",),
            vmem_limit_bytes=vmem_limit),
    )(r_flat, rT, mask_bias, W_fused, b_fused, WgkT, bgk, W_O_all)

    # ---- Kernel 2: unembed; x resident, W_U streamed exactly once. --------
    W_U_pad = jnp.pad(params["W_U"].astype(jnp.float32),
                      ((0, Dp - D), (0, Vp - V)))                     # (Dp, Vp)
    b_U_pad = jnp.pad(params["b_U"].astype(jnp.float32),
                      (0, Vp - V)).reshape(1, Vp)
    v_tile = _pick_vocab_tile(Vp, Dp, M, vmem_limit)
    nv = Vp // v_tile

    logits_flat = pl.pallas_call(
        unembed_kernel,
        out_shape=jax.ShapeDtypeStruct((M, Vp), jnp.float32),
        grid_spec=pltpu.PrefetchScalarGridSpec(
            num_scalar_prefetch=0,
            grid=(nv,),
            in_specs=[
                pl.BlockSpec((M, Dp), lambda v: (0, 0)),              # resident activations
                pl.BlockSpec((Dp, v_tile), lambda v: (0, v)),         # streamed W_U tiles
                pl.BlockSpec((1, v_tile), lambda v: (0, v)),          # streamed bias tiles
            ],
            out_specs=pl.BlockSpec((M, v_tile), lambda v: (0, v)),
        ),
        compiler_params=pltpu.CompilerParams(
            dimension_semantics=("parallel",),
            vmem_limit_bytes=vmem_limit),
    )(resid_post, W_U_pad, b_U_pad)

    return logits_flat.reshape(B, S, Vp)[:, :, :V]


# ----------------------------------------------------------------------------
# Pure-JAX reference (mirrors the PyTorch forward) for a correctness check.
# ----------------------------------------------------------------------------
def reference_forward(tokens, p):
    hi = jax.lax.Precision.HIGHEST
    r = p["W_E"][tokens]
    eps = 1e-12
    Wv = p["W_V"] / jnp.maximum(
        jnp.linalg.norm(p["W_V"], axis=1, keepdims=True), eps)
    Wo = p["W_O"] / jnp.maximum(
        jnp.linalg.norm(p["W_O"], axis=2, keepdims=True), eps)
    q = jnp.einsum("hmd,bpm->bphd", p["W_Q"], r, precision=hi) + p["b_Q"]
    qg = jnp.einsum("hmg,bpm->bphg", p["W_gate_Q"], r, precision=hi) + p["b_gate_Q"]
    k = jnp.einsum("hmd,bpm->bphd", p["W_K"], r, precision=hi) + p["b_K"]
    kg = jnp.einsum("hmg,bpm->bphg", p["W_gate_K"], r, precision=hi) + p["b_gate_K"]
    v = jnp.einsum("hmd,bpm->bphd", Wv, r, precision=hi) + p["b_V"]
    scores = jnp.einsum("bqhd,bkhd->bhqk", q, k, precision=hi)
    gate = jnp.clip(jnp.einsum("bqhg,bkhg->bhqk", qg, kg, precision=hi), 0.0, 1.0)
    d_head = p["W_Q"].shape[-1]
    S = r.shape[1]
    mask = jnp.triu(jnp.ones((S, S), dtype=bool), k=1)
    scores = jnp.where(mask[None, None], -jnp.inf, scores / math.sqrt(d_head))
    sm = jax.nn.softmax(scores, axis=-1)
    z = jnp.einsum("bhqk,bkhd->bhqd", gate * sm, v, precision=hi)
    per_head = jnp.einsum("bhqd,hdm->bqhm", z, Wo, precision=hi)
    resid_post = per_head.sum(axis=2) + r
    return jnp.einsum("bpm,mv->bpv", resid_post, p["W_U"], precision=hi) + p["b_U"]


if __name__ == "__main__":
    # Small, deterministic configuration.
    batch, seq = 2, 8
    d_model, d_head, d_gate = 32, 8, 1
    expansion_factor, orig_heads = 2, 2
    n_heads = expansion_factor * orig_heads
    d_vocab = 64

    key = jax.random.PRNGKey(0)
    ks = jax.random.split(key, 12)
    f32 = jnp.float32
    params = {
        "W_Q": 0.1 * jax.random.normal(ks[0], (n_heads, d_model, d_head), f32),
        "W_K": 0.1 * jax.random.normal(ks[1], (n_heads, d_model, d_head), f32),
        "W_V": 0.1 * jax.random.normal(ks[2], (n_heads, d_model, d_head), f32),
        "W_O": 0.1 * jax.random.normal(ks[3], (n_heads, d_head, d_model), f32),
        "b_Q": 0.1 * jax.random.normal(ks[4], (n_heads, d_head), f32),
        "b_K": 0.1 * jax.random.normal(ks[5], (n_heads, d_head), f32),
        "b_V": 0.1 * jax.random.normal(ks[6], (n_heads, d_head), f32),
        # TODO(synk): nn.init.orthogonal_ not reproduced bit-exactly; deterministic normal init used.
        "W_gate_Q": 0.2 * jax.random.normal(ks[7], (n_heads, d_model, d_gate), f32),
        "W_gate_K": 0.2 * jax.random.normal(ks[8], (n_heads, d_model, d_gate), f32),
        "b_gate_Q": jnp.zeros((n_heads, d_gate), f32),
        "b_gate_K": jnp.zeros((n_heads, d_gate), f32),
        "W_E": 0.1 * jax.random.normal(ks[9], (d_vocab, d_model), f32),
        "W_U": 0.1 * jax.random.normal(ks[10], (d_model, d_vocab), f32),
        "b_U": jnp.zeros((d_vocab,), f32),
    }

    tokens = jax.random.randint(ks[11], (batch, seq), 0, d_vocab, dtype=jnp.int32)

    logits = jax.jit(modified_attention_transformer)(tokens, params)
    logits = jax.block_until_ready(logits)

    ref = reference_forward(tokens, params)
    assert logits.shape == (batch, seq, d_vocab)
    assert jnp.allclose(logits, ref, atol=1e-3, rtol=1e-3), "mismatch vs reference"

    print("KERNEL_OK")
</pallas_src>

<mosaic_0001>
module attributes {stable_mosaic.version = 11 : i64} {
  func.func @unembed_kernel(%arg0: i32, %arg1: memref<16x128xf32, #tpu.memory_space<vmem>>, %arg2: memref<128x128xf32, #tpu.memory_space<vmem>>, %arg3: memref<1x128xf32, #tpu.memory_space<vmem>>, %arg4: memref<16x128xf32, #tpu.memory_space<vmem>>) attributes {dimension_semantics = [#tpu.dimension_semantics<parallel>], iteration_bounds = array<i64: 1>, scalar_prefetch = 0 : i64, scratch_operands = 0 : i64, tpu.core_type = #tpu.core_type<tc>, window_params = [{pipeline_mode = #tpu.pipeline_mode<synchronous>, transform_indices = @transform_0, window_bounds = array<i64: 16, 128>}, {transform_indices = @transform_1, window_bounds = array<i64: 128, 128>}, {transform_indices = @transform_2, window_bounds = array<i64: 1, 128>}, {transform_indices = @transform_3, window_bounds = array<i64: 16, 128>}]} {
    %c0 = arith.constant 0 : index
    %c0_0 = arith.constant 0 : index
    %0 = vector.load %arg1[%c0, %c0_0] : memref<16x128xf32, #tpu.memory_space<vmem>>, vector<16x128xf32>
    %c0_1 = arith.constant 0 : index
    %c0_2 = arith.constant 0 : index
    %1 = vector.load %arg2[%c0_1, %c0_2] : memref<128x128xf32, #tpu.memory_space<vmem>>, vector<128x128xf32>
    %cst = arith.constant dense<0.000000e+00> : vector<16x128xf32>
    %2 = tpu.matmul %0, %1, %cst {dimension_numbers = #tpu.dot_dimension_numbers<[1], [0], [0], [1], [0, 0, 1, 1], [], []>} : vector<16x128xf32>, vector<128x128xf32>, vector<16x128xf32> -> vector<16x128xf32>
    %c0_3 = arith.constant 0 : index
    %c0_4 = arith.constant 0 : index
    %3 = vector.load %arg3[%c0_3, %c0_4] : memref<1x128xf32, #tpu.memory_space<vmem>>, vector<1x128xf32>
    %4 = vector.broadcast %3 : vector<1x128xf32> to vector<16x128xf32>
    %5 = arith.addf %2, %4 : vector<16x128xf32>
    %c0_5 = arith.constant 0 : index
    %c0_6 = arith.constant 0 : index
    %6 = vector.load %arg4[%c0_5, %c0_6] : memref<16x128xf32, #tpu.memory_space<vmem>>, vector<16x128xf32>
    tpu.vector_store %arg4[%c0_5, %c0_6], %5 {strides = array<i32>} : memref<16x128xf32, #tpu.memory_space<vmem>>, vector<16x128xf32>,
    return
  }
  func.func @transform_0(%arg0: i32) -> (i32, i32) {
    %c0_i32 = arith.constant 0 : i32
    %c0_i32_0 = arith.constant 0 : i32
    %c0_i32_1 = arith.constant 0 : i32
    return %c0_i32, %c0_i32_0 : i32, i32
  }
  func.func @transform_1(%arg0: i32) -> (i32, i32) {
    %c0_i32 = arith.constant 0 : i32
    %c0_i32_0 = arith.constant 0 : i32
    return %c0_i32, %arg0 : i32, i32
  }
  func.func @transform_2(%arg0: i32) -> (i32, i32) {
    %c0_i32 = arith.constant 0 : i32
    %c0_i32_0 = arith.constant 0 : i32
    return %c0_i32, %arg0 : i32, i32
  }
  func.func @transform_3(%arg0: i32) -> (i32, i32) {
    %c0_i32 = arith.constant 0 : i32
    %c0_i32_0 = arith.constant 0 : i32
    return %c0_i32, %arg0 : i32, i32
  }
}

module attributes {stable_mosaic.version = 11 : i64} {
  func.func @attn_kernel(%arg0: i32, %arg1: memref<16x128xf32, #tpu.memory_space<vmem>>, %arg2: memref<128x16xf32, #tpu.memory_space<vmem>>, %arg3: memref<16x16xf32, #tpu.memory_space<vmem>>, %arg4: memref<128x100xf32, #tpu.memory_space<vmem>>, %arg5: memref<1x100xf32, #tpu.memory_space<vmem>>, %arg6: memref<4x128xf32, #tpu.memory_space<vmem>>, %arg7: memref<4x1xf32, #tpu.memory_space<vmem>>, %arg8: memref<32x128xf32, #tpu.memory_space<vmem>>, %arg9: memref<16x128xf32, #tpu.memory_space<vmem>>) attributes {dimension_semantics = [#tpu.dimension_semantics<arbitrary>], iteration_bounds = array<i64: 1>, scalar_prefetch = 0 : i64, scratch_operands = 0 : i64, tpu.core_type = #tpu.core_type<tc>, window_params = [{pipeline_mode = #tpu.pipeline_mode<synchronous>, transform_indices = @transform_0, window_bounds = array<i64: 16, 128>}, {pipeline_mode = #tpu.pipeline_mode<synchronous>, transform_indices = @transform_1, window_bounds = array<i64: 128, 16>}, {pipeline_mode = #tpu.pipeline_mode<synchronous>, transform_indices = @transform_2, window_bounds = array<i64: 16, 16>}, {pipeline_mode = #tpu.pipeline_mode<synchronous>, transform_indices = @transform_3, window_bounds = array<i64: 128, 100>}, {pipeline_mode = #tpu.pipeline_mode<synchronous>, transform_indices = @transform_4, window_bounds = array<i64: 1, 100>}, {pipeline_mode = #tpu.pipeline_mode<synchronous>, transform_indices = @transform_5, window_bounds = array<i64: 4, 128>}, {pipeline_mode = #tpu.pipeline_mode<synchronous>, transform_indices = @transform_6, window_bounds = array<i64: 4, 1>}, {pipeline_mode = #tpu.pipeline_mode<synchronous>, transform_indices = @transform_7, window_bounds = array<i64: 32, 128>}, {pipeline_mode = #tpu.pipeline_mode<synchronous>, transform_indices = @transform_8, window_bounds = array<i64: 16, 128>}]} {
    %c0 = arith.constant 0 : index
    %c0_0 = arith.constant 0 : index
    %0 = vector.load %arg1[%c0, %c0_0] : memref<16x128xf32, #tpu.memory_space<vmem>>, vector<16x128xf32>
    %c0_1 = arith.constant 0 : index
    %c0_2 = arith.constant 0 : index
    %1 = vector.load %arg4[%c0_1, %c0_2] : memref<128x100xf32, #tpu.memory_space<vmem>>, vector<128x100xf32>
    %cst = arith.constant dense<0.000000e+00> : vector<16x100xf32>
    %2 = tpu.matmul %0, %1, %cst {dimension_numbers = #tpu.dot_dimension_numbers<[1], [0], [0], [1], [0, 0, 1, 1], [], []>} : vector<16x128xf32>, vector<128x100xf32>, vector<16x100xf32> -> vector<16x100xf32>
    %c0_3 = arith.constant 0 : index
    %c0_4 = arith.constant 0 : index
    %3 = vector.load %arg5[%c0_3, %c0_4] : memref<1x100xf32, #tpu.memory_space<vmem>>, vector<1x100xf32>
    %4 = vector.broadcast %3 : vector<1x100xf32> to vector<16x100xf32>
    %5 = arith.addf %2, %4 : vector<16x100xf32>
    %c0_5 = arith.constant 0 : index
    %c0_6 = arith.constant 0 : index
    %6 = vector.load %arg6[%c0_5, %c0_6] : memref<4x128xf32, #tpu.memory_space<vmem>>, vector<4x128xf32>
    %c0_7 = arith.constant 0 : index
    %c0_8 = arith.constant 0 : index
    %7 = vector.load %arg2[%c0_7, %c0_8] : memref<128x16xf32, #tpu.memory_space<vmem>>, vector<128x16xf32>
    %cst_9 = arith.constant dense<0.000000e+00> : vector<4x16xf32>
    %8 = tpu.matmul %6, %7, %cst_9 {dimension_numbers = #tpu.dot_dimension_numbers<[1], [0], [0], [1], [0, 0, 1, 1], [], []>} : vector<4x128xf32>, vector<128x16xf32>, vector<4x16xf32> -> vector<4x16xf32>
    %c0_10 = arith.constant 0 : index
    %c0_11 = arith.constant 0 : index
    %9 = vector.load %arg7[%c0_10, %c0_11] : memref<4x1xf32, #tpu.memory_space<vmem>>, vector<4x1xf32>
    %10 = vector.broadcast %9 : vector<4x1xf32> to vector<4x16xf32>
    %11 = arith.addf %8, %10 : vector<4x16xf32>
    %c0_12 = arith.constant 0 : index
    %c0_13 = arith.constant 0 : index
    %12 = vector.load %arg3[%c0_12, %c0_13] : memref<16x16xf32, #tpu.memory_space<vmem>>, vector<16x16xf32>
    %13 = vector.extract_strided_slice %5 {offsets = [0, 0], sizes = [16, 8], strides = [1, 1]} : vector<16x100xf32> to vector<16x8xf32>
    %14 = vector.extract_strided_slice %5 {offsets = [0, 32], sizes = [16, 8], strides = [1, 1]} : vector<16x100xf32> to vector<16x8xf32>
    %15 = vector.extract_strided_slice %5 {offsets = [0, 64], sizes = [16, 8], strides = [1, 1]} : vector<16x100xf32> to vector<16x8xf32>
    %16 = vector.extract_strided_slice %5 {offsets = [0, 96], sizes = [16, 1], strides = [1, 1]} : vector<16x100xf32> to vector<16x1xf32>
    %17 = vector.extract_strided_slice %11 {offsets = [0, 0], sizes = [1, 16], strides = [1, 1]} : vector<4x16xf32> to vector<1x16xf32>
    "tpu.trace_start"() <{level = 10 : i32, message = "qd,kd->qk"}> : () -> ()
    %cst_14 = arith.constant dense<0.000000e+00> : vector<16x16xf32>
    %18 = tpu.matmul %13, %14, %cst_14 {dimension_numbers = #tpu.dot_dimension_numbers<[1], [1], [0], [0], [0, 0, 1, 0], [], []>} : vector<16x8xf32>, vector<16x8xf32>, vector<16x16xf32> -> vector<16x16xf32>
    "tpu.trace_stop"() : () -> ()
    %cst_15 = arith.constant 0.353553385 : f32
    %19 = vector.broadcast %cst_15 : f32 to vector<16x16xf32>
    %20 = arith.mulf %18, %19 : vector<16x16xf32>
    %21 = arith.addf %20, %12 : vector<16x16xf32>
    %cst_16 = arith.constant dense<0xFF800000> : vector<16xf32>
    %22 = vector.multi_reduction <maximumf>, %21, %cst_16 [1] : vector<16x16xf32> to vector<16xf32>
    %23 = vector.shape_cast %22 : vector<16xf32> to vector<16x1xf32>
    %24 = vector.broadcast %23 : vector<16x1xf32> to vector<16x16xf32>
    %25 = arith.subf %21, %24 : vector<16x16xf32>
    %26 = math.exp %25 : vector<16x16xf32>
    %cst_17 = arith.constant dense<0.000000e+00> : vector<16xf32>
    %27 = vector.multi_reduction <add>, %26, %cst_17 [1] : vector<16x16xf32> to vector<16xf32>
    %28 = vector.shape_cast %27 : vector<16xf32> to vector<16x1xf32>
    %29 = vector.broadcast %28 : vector<16x1xf32> to vector<16x16xf32>
    %30 = arith.divf %26, %29 : vector<16x16xf32>
    %31 = vector.shape_cast %16 : vector<16x1xf32> to vector<16x1xf32>
    %32 = vector.broadcast %31 : vector<16x1xf32> to vector<16x16xf32>
    %33 = vector.shape_cast %17 : vector<1x16xf32> to vector<1x16xf32>
    %34 = vector.broadcast %33 : vector<1x16xf32> to vector<16x16xf32>
    %35 = arith.mulf %32, %34 : vector<16x16xf32>
    %cst_18 = arith.constant 0.000000e+00 : f32
    %cst_19 = arith.constant 1.000000e+00 : f32
    %36 = vector.broadcast %cst_18 : f32 to vector<16x16xf32>
    %37 = arith.maximumf %36, %35 : vector<16x16xf32>
    %38 = vector.broadcast %cst_19 : f32 to vector<16x16xf32>
    %39 = arith.minimumf %38, %37 : vector<16x16xf32>
    %40 = arith.mulf %39, %30 : vector<16x16xf32>
    %cst_20 = arith.constant dense<0.000000e+00> : vector<16x8xf32>
    %41 = tpu.matmul %40, %15, %cst_20 {dimension_numbers = #tpu.dot_dimension_numbers<[1], [0], [0], [1], [0, 0, 1, 1], [], []>} : vector<16x16xf32>, vector<16x8xf32>, vector<16x8xf32> -> vector<16x8xf32>
    %c0_21 = arith.constant 0 : index
    %c0_22 = arith.constant 0 : index
    %42 = vector.load %arg8[%c0_21, %c0_22] : memref<32x128xf32, #tpu.memory_space<vmem>>, vector<8x128xf32>
    %cst_23 = arith.constant dense<0.000000e+00> : vector<16x128xf32>
    %43 = tpu.matmul %41, %42, %cst_23 {dimension_numbers = #tpu.dot_dimension_numbers<[1], [0], [0], [1], [0, 0, 1, 1], [], []>} : vector<16x8xf32>, vector<8x128xf32>, vector<16x128xf32> -> vector<16x128xf32>
    %44 = arith.addf %0, %43 : vector<16x128xf32>
    %45 = vector.extract_strided_slice %5 {offsets = [0, 8], sizes = [16, 8], strides = [1, 1]} : vector<16x100xf32> to vector<16x8xf32>
    %46 = vector.extract_strided_slice %5 {offsets = [0, 40], sizes = [16, 8], strides = [1, 1]} : vector<16x100xf32> to vector<16x8xf32>
    %47 = vector.extract_strided_slice %5 {offsets = [0, 72], sizes = [16, 8], strides = [1, 1]} : vector<16x100xf32> to vector<16x8xf32>
    %48 = vector.extract_strided_slice %5 {offsets = [0, 97], sizes = [16, 1], strides = [1, 1]} : vector<16x100xf32> to vector<16x1xf32>
    %49 = vector.extract_strided_slice %11 {offsets = [1, 0], sizes = [1, 16], strides = [1, 1]} : vector<4x16xf32> to vector<1x16xf32>
    "tpu.trace_start"() <{level = 10 : i32, message = "qd,kd->qk"}> : () -> ()
    %cst_24 = arith.constant dense<0.000000e+00> : vector<16x16xf32>
    %50 = tpu.matmul %45, %46, %cst_24 {dimension_numbers = #tpu.dot_dimension_numbers<[1], [1], [0], [0], [0, 0, 1, 0], [], []>} : vector<16x8xf32>, vector<16x8xf32>, vector<16x16xf32> -> vector<16x16xf32>
    "tpu.trace_stop"() : () -> ()
    %cst_25 = arith.constant 0.353553385 : f32
    %51 = vector.broadcast %cst_25 : f32 to vector<16x16xf32>
    %52 = arith.mulf %50, %51 : vector<16x16xf32>
    %53 = arith.addf %52, %12 : vector<16x16xf32>
    %cst_26 = arith.constant dense<0xFF800000> : vector<16xf32>
    %54 = vector.multi_reduction <maximumf>, %53, %cst_26 [1] : vector<16x16xf32> to vector<16xf32>
    %55 = vector.shape_cast %54 : vector<16xf32> to vector<16x1xf32>
    %56 = vector.broadcast %55 : vector<16x1xf32> to vector<16x16xf32>
    %57 = arith.subf %53, %56 : vector<16x16xf32>
    %58 = math.exp %57 : vector<16x16xf32>
    %cst_27 = arith.constant dense<0.000000e+00> : vector<16xf32>
    %59 = vector.multi_reduction <add>, %58, %cst_27 [1] : vector<16x16xf32> to vector<16xf32>
    %60 = vector.shape_cast %59 : vector<16xf32> to vector<16x1xf32>
    %61 = vector.broadcast %60 : vector<16x1xf32> to vector<16x16xf32>
    %62 = arith.divf %58, %61 : vector<16x16xf32>
    %63 = vector.shape_cast %48 : vector<16x1xf32> to vector<16x1xf32>
    %64 = vector.broadcast %63 : vector<16x1xf32> to vector<16x16xf32>
    %65 = vector.shape_cast %49 : vector<1x16xf32> to vector<1x16xf32>
    %66 = vector.broadcast %65 : vector<1x16xf32> to vector<16x16xf32>
    %67 = arith.mulf %64, %66 : vector<16x16xf32>
    %cst_28 = arith.constant 0.000000e+00 : f32
    %cst_29 = arith.constant 1.000000e+00 : f32
    %68 = vector.broadcast %cst_28 : f32 to vector<16x16xf32>
    %69 = arith.maximumf %68, %67 : vector<16x16xf32>
    %70 = vector.broadcast %cst_29 : f32 to vector<16x16xf32>
    %71 = arith.minimumf %70, %69 : vector<16x16xf32>
    %72 = arith.mulf %71, %62 : vector<16x16xf32>
    %cst_30 = arith.constant dense<0.000000e+00> : vector<16x8xf32>
    %73 = tpu.matmul %72, %47, %cst_30 {dimension_numbers = #tpu.dot_dimension_numbers<[1], [0], [0], [1], [0, 0, 1, 1], [], []>} : vector<16x16xf32>, vector<16x8xf32>, vector<16x8xf32> -> vector<16x8xf32>
    %c8 = arith.constant 8 : index
    %c0_31 = arith.constant 0 : index
    %74 = vector.load %arg8[%c8, %c0_31] : memref<32x128xf32, #tpu.memory_space<vmem>>, vector<8x128xf32>
    %cst_32 = arith.constant dense<0.000000e+00> : vector<16x128xf32>
    %75 = tpu.matmul %73, %74, %cst_32 {dimension_numbers = #tpu.dot_dimension_numbers<[1], [0], [0], [1], [0, 0, 1, 1], [], []>} : vector<16x8xf32>, vector<8x128xf32>, vector<16x128xf32> -> vector<16x128xf32>
    %76 = arith.addf %44, %75 : vector<16x128xf32>
    %77 = vector.extract_strided_slice %5 {offsets = [0, 16], sizes = [16, 8], strides = [1, 1]} : vector<16x100xf32> to vector<16x8xf32>
    %78 = vector.extract_strided_slice %5 {offsets = [0, 48], sizes = [16, 8], strides = [1, 1]} : vector<16x100xf32> to vector<16x8xf32>
    %79 = vector.extract_strided_slice %5 {offsets = [0, 80], sizes = [16, 8], strides = [1, 1]} : vector<16x100xf32> to vector<16x8xf32>
    %80 = vector.extract_strided_slice %5 {offsets = [0, 98], sizes = [16, 1], strides = [1, 1]} : vector<16x100xf32> to vector<16x1xf32>
    %81 = vector.extract_strided_slice %11 {offsets = [2, 0], sizes = [1, 16], strides = [1, 1]} : vector<4x16xf32> to vector<1x16xf32>
    "tpu.trace_start"() <{level = 10 : i32, message = "qd,kd->qk"}> : () -> ()
    %cst_33 = arith.constant dense<0.000000e+00> : vector<16x16xf32>
    %82 = tpu.matmul %77, %78, %cst_33 {dimension_numbers = #tpu.dot_dimension_numbers<[1], [1], [0], [0], [0, 0, 1, 0], [], []>} : vector<16x8xf32>, vector<16x8xf32>, vector<16x16xf32> -> vector<16x16xf32>
    "tpu.trace_stop"() : () -> ()
    %cst_34 = arith.constant 0.353553385 : f32
    %83 = vector.broadcast %cst_34 : f32 to vector<16x16xf32>
    %84 = arith.mulf %82, %83 : vector<16x16xf32>
    %85 = arith.addf %84, %12 : vector<16x16xf32>
    %cst_35 = arith.constant dense<0xFF800000> : vector<16xf32>
    %86 = vector.multi_reduction <maximumf>, %85, %cst_35 [1] : vector<16x16xf32> to vector<16xf32>
    %87 = vector.shape_cast %86 : vector<16xf32> to vector<16x1xf32>
    %88 = vector.broadcast %87 : vector<16x1xf32> to vector<16x16xf32>
    %89 = arith.subf %85, %88 : vector<16x16xf32>
    %90 = math.exp %89 : vector<16x16xf32>
    %cst_36 = arith.constant dense<0.000000e+00> : vector<16xf32>
    %91 = vector.multi_reduction <add>, %90, %cst_36 [1] : vector<16x16xf32> to vector<16xf32>
    %92 = vector.shape_cast %91 : vector<16xf32> to vector<16x1xf32>
    %93 = vector.broadcast %92 : vector<16x1xf32> to vector<16x16xf32>
    %94 = arith.divf %90, %93 : vector<16x16xf32>
    %95 = vector.shape_cast %80 : vector<16x1xf32> to vector<16x1xf32>
    %96 = vector.broadcast %95 : vector<16x1xf32> to vector<16x16xf32>
    %97 = vector.shape_cast %81 : vector<1x16xf32> to vector<1x16xf32>
    %98 = vector.broadcast %97 : vector<1x16xf32> to vector<16x16xf32>
    %99 = arith.mulf %96, %98 : vector<16x16xf32>
    %cst_37 = arith.constant 0.000000e+00 : f32
    %cst_38 = arith.constant 1.000000e+00 : f32
    %100 = vector.broadcast %cst_37 : f32 to vector<16x16xf32>
    %101 = arith.maximumf %100, %99 : vector<16x16xf32>
    %102 = vector.broadcast %cst_38 : f32 to vector<16x16xf32>
    %103 = arith.minimumf %102, %101 : vector<16x16xf32>
    %104 = arith.mulf %103, %94 : vector<16x16xf32>
    %cst_39 = arith.constant dense<0.000000e+00> : vector<16x8xf32>
    %105 = tpu.matmul %104, %79, %cst_39 {dimension_numbers = #tpu.dot_dimension_numbers<[1], [0], [0], [1], [0, 0, 1, 1], [], []>} : vector<16x16xf32>, vector<16x8xf32>, vector<16x8xf32> -> vector<16x8xf32>
    %c16 = arith.constant 16 : index
    %c0_40 = arith.constant 0 : index
    %106 = vector.load %arg8[%c16, %c0_40] : memref<32x128xf32, #tpu.memory_space<vmem>>, vector<8x128xf32>
    %cst_41 = arith.constant dense<0.000000e+00> : vector<16x128xf32>
    %107 = tpu.matmul %105, %106, %cst_41 {dimension_numbers = #tpu.dot_dimension_numbers<[1], [0], [0], [1], [0, 0, 1, 1], [], []>} : vector<16x8xf32>, vector<8x128xf32>, vector<16x128xf32> -> vector<16x128xf32>
    %108 = arith.addf %76, %107 : vector<16x128xf32>
    %109 = vector.extract_strided_slice %5 {offsets = [0, 24], sizes = [16, 8], strides = [1, 1]} : vector<16x100xf32> to vector<16x8xf32>
    %110 = vector.extract_strided_slice %5 {offsets = [0, 56], sizes = [16, 8], strides = [1, 1]} : vector<16x100xf32> to vector<16x8xf32>
    %111 = vector.extract_strided_slice %5 {offsets = [0, 88], sizes = [16, 8], strides = [1, 1]} : vector<16x100xf32> to vector<16x8xf32>
    %112 = vector.extract_strided_slice %5 {offsets = [0, 99], sizes = [16, 1], strides = [1, 1]} : vector<16x100xf32> to vector<16x1xf32>
    %113 = vector.extract_strided_slice %11 {offsets = [3, 0], sizes = [1, 16], strides = [1, 1]} : vector<4x16xf32> to vector<1x16xf32>
    "tpu.trace_start"() <{level = 10 : i32, message = "qd,kd->qk"}> : () -> ()
    %cst_42 = arith.constant dense<0.000000e+00> : vector<16x16xf32>
    %114 = tpu.matmul %109, %110, %cst_42 {dimension_numbers = #tpu.dot_dimension_numbers<[1], [1], [0], [0], [0, 0, 1, 0], [], []>} : vector<16x8xf32>, vector<16x8xf32>, vector<16x16xf32> -> vector<16x16xf32>
    "tpu.trace_stop"() : () -> ()
    %cst_43 = arith.constant 0.353553385 : f32
    %115 = vector.broadcast %cst_43 : f32 to vector<16x16xf32>
    %116 = arith.mulf %114, %115 : vector<16x16xf32>
    %117 = arith.addf %116, %12 : vector<16x16xf32>
    %cst_44 = arith.constant dense<0xFF800000> : vector<16xf32>
    %118 = vector.multi_reduction <maximumf>, %117, %cst_44 [1] : vector<16x16xf32> to vector<16xf32>
    %119 = vector.shape_cast %118 : vector<16xf32> to vector<16x1xf32>
    %120 = vector.broadcast %119 : vector<16x1xf32> to vector<16x16xf32>
    %121 = arith.subf %117, %120 : vector<16x16xf32>
    %122 = math.exp %121 : vector<16x16xf32>
    %cst_45 = arith.constant dense<0.000000e+00> : vector<16xf32>
    %123 = vector.multi_reduction <add>, %122, %cst_45 [1] : vector<16x16xf32> to vector<16xf32>
    %124 = vector.shape_cast %123 : vector<16xf32> to vector<16x1xf32>
    %125 = vector.broadcast %124 : vector<16x1xf32> to vector<16x16xf32>
    %126 = arith.divf %122, %125 : vector<16x16xf32>
    %127 = vector.shape_cast %112 : vector<16x1xf32> to vector<16x1xf32>
    %128 = vector.broadcast %127 : vector<16x1xf32> to vector<16x16xf32>
    %129 = vector.shape_cast %113 : vector<1x16xf32> to vector<1x16xf32>
    %130 = vector.broadcast %129 : vector<1x16xf32> to vector<16x16xf32>
    %131 = arith.mulf %128, %130 : vector<16x16xf32>
    %cst_46 = arith.constant 0.000000e+00 : f32
    %cst_47 = arith.constant 1.000000e+00 : f32
    %132 = vector.broadcast %cst_46 : f32 to vector<16x16xf32>
    %133 = arith.maximumf %132, %131 : vector<16x16xf32>
    %134 = vector.broadcast %cst_47 : f32 to vector<16x16xf32>
    %135 = arith.minimumf %134, %133 : vector<16x16xf32>
    %136 = arith.mulf %135, %126 : vector<16x16xf32>
    %cst_48 = arith.constant dense<0.000000e+00> : vector<16x8xf32>
    %137 = tpu.matmul %136, %111, %cst_48 {dimension_numbers = #tpu.dot_dimension_numbers<[1], [0], [0], [1], [0, 0, 1, 1], [], []>} : vector<16x16xf32>, vector<16x8xf32>, vector<16x8xf32> -> vector<16x8xf32>
    %c24 = arith.constant 24 : index
    %c0_49 = arith.constant 0 : index
    %138 = vector.load %arg8[%c24, %c0_49] : memref<32x128xf32, #tpu.memory_space<vmem>>, vector<8x128xf32>
    %cst_50 = arith.constant dense<0.000000e+00> : vector<16x128xf32>
    %139 = tpu.matmul %137, %138, %cst_50 {dimension_numbers = #tpu.dot_dimension_numbers<[1], [0], [0], [1], [0, 0, 1, 1], [], []>} : vector<16x8xf32>, vector<8x128xf32>, vector<16x128xf32> -> vector<16x128xf32>
    %140 = arith.addf %108, %139 : vector<16x128xf32>
    %c0_51 = arith.constant 0 : index
    %c0_52 = arith.constant 0 : index
    %141 = vector.load %arg9[%c0_51, %c0_52] : memref<16x128xf32, #tpu.memory_space<vmem>>, vector<16x128xf32>
    tpu.vector_store %arg9[%c0_51, %c0_52], %140 {strides = array<i32>} : memref<16x128xf32, #tpu.memory_space<vmem>>, vector<16x128xf32>,
    return
  }
  func.func @transform_0(%arg0: i32) -> (i32, i32) {
    %c0_i32 = arith.constant 0 : i32
    %c0_i32_0 = arith.constant 0 : i32
    %c0_i32_1 = arith.constant 0 : i32
    return %c0_i32, %c0_i32_0 : i32, i32
  }
  func.func @transform_1(%arg0: i32) -> (i32, i32) {
    %c0_i32 = arith.constant 0 : i32
    %c0_i32_0 = arith.constant 0 : i32
    %c0_i32_1 = arith.constant 0 : i32
    return %c0_i32, %c0_i32_0 : i32, i32
  }
  func.func @transform_2(%arg0: i32) -> (i32, i32) {
    %c0_i32 = arith.constant 0 : i32
    %c0_i32_0 = arith.constant 0 : i32
    %c0_i32_1 = arith.constant 0 : i32
    return %c0_i32, %c0_i32_0 : i32, i32
  }
  func.func @transform_3(%arg0: i32) -> (i32, i32) {
    %c0_i32 = arith.constant 0 : i32
    %c0_i32_0 = arith.constant 0 : i32
    %c0_i32_1 = arith.constant 0 : i32
    return %c0_i32, %c0_i32_0 : i32, i32
  }
  func.func @transform_4(%arg0: i32) -> (i32, i32) {
    %c0_i32 = arith.constant 0 : i32
    %c0_i32_0 = arith.constant 0 : i32
    %c0_i32_1 = arith.constant 0 : i32
    return %c0_i32, %c0_i32_0 : i32, i32
  }
  func.func @transform_5(%arg0: i32) -> (i32, i32) {
    %c0_i32 = arith.constant 0 : i32
    %c0_i32_0 = arith.constant 0 : i32
    %c0_i32_1 = arith.constant 0 : i32
    return %c0_i32, %c0_i32_0 : i32, i32
  }
  func.func @transform_6(%arg0: i32) -> (i32, i32) {
    %c0_i32 = arith.constant 0 : i32
    %c0_i32_0 = arith.constant 0 : i32
    %c0_i32_1 = arith.constant 0 : i32
    return %c0_i32, %c0_i32_0 : i32, i32
  }
  func.func @transform_7(%arg0: i32) -> (i32, i32) {
    %c0_i32 = arith.constant 0 : i32
    %c0_i32_0 = arith.constant 0 : i32
    %c0_i32_1 = arith.constant 0 : i32
    return %c0_i32, %c0_i32_0 : i32, i32
  }
  func.func @transform_8(%arg0: i32) -> (i32, i32) {
    %c0_i32 = arith.constant 0 : i32
    %c0_i32_0 = arith.constant 0 : i32
    %c0_i32_1 = arith.constant 0 : i32
    return %c0_i32, %c0_i32_0 : i32, i32
  }
}

</mosaic_0001>

<llo_original>
// kernel: modified_attention_transformer.3
$region0: #{modified_attention_transformer.3}
  #allocation0 [shape = 'u32[]', space=smem, size = 0x4, offset = 0x4, fixed_abs, tag = 'smem constant byte address 0x4 - core index']
  #allocation1 [shape = 'u32[144,128]{1,0:T(1,128)}', space=vmem, size = 0x12000, scoped, tag = 'internal scratch']
  %s0 = inlined_call_operand.vmem [shape: f32[16,128], index: 0, kind: input, shape index: {}]
  %s1 = inlined_call_operand.vmem [shape: f32[128,128], index: 1, kind: input, shape index: {}]
  %s2 = inlined_call_operand.vmem [shape: f32[1,128], index: 2, kind: input, shape index: {}]
  %s3 = inlined_call_operand.hbm [shape: f32[16,128], index: 3, kind: output, shape index: {}]
  %s4 = sld [smem:[#allocation0]]
  $region22: #{modified_attention_transformer.3} parent=0
    _
  %s6 = ssub.s32 1, %s4
  %s7 = scalar_select 0, %s6, %s4
  $region1: #{modified_attention_transformer.3} parent=0
    #allocation2 [shape = 'u8[8192]{0}', space=vmem, size = 0x2000, scoped, tag = 'output window, operand 0, single buffered']
    #allocation3 [shape = 's32[1]{0}', space=sflag, size = 0x4, scoped, tag = 'scoped memory for modified_attention_transformer.3']
    %8 = vsyncpa [#allocation3], 0
    // Predicated region
    $region2: #{modified_attention_transformer.3} parent=1 // pred_check
      _
    $region3: #{modified_attention_transformer.3} parent=1 // pred_check_branch
      %10 = sbr.rel (0) target = $region5
    $region4: #{modified_attention_transformer.3} parent=1 // pred_region
      _
    $region5: #{modified_attention_transformer.3} parent=1 // pred_fallthru
      _
    // Predicated region
    $region6: #{modified_attention_transformer.3} parent=1 // pred_check
      _
    $region7: #{modified_attention_transformer.3} parent=1 // pred_check_branch
      %12 = sbr.rel (0) target = $region9
    $region8: #{modified_attention_transformer.3} parent=1 // pred_region
      _
    $region9: #{modified_attention_transformer.3} parent=1 // pred_fallthru
      _
    // Predicated region
    $region10: #{modified_attention_transformer.3} parent=1 // pred_check
      _
    $region11: #{modified_attention_transformer.3} parent=1 // pred_check_branch
      %14 = sbr.rel (0) target = $region13
    $region12: #{modified_attention_transformer.3} parent=1 // pred_region
      _
    $region13: #{modified_attention_transformer.3} parent=1 // pred_fallthru
      _
    %v15 = vld [vmem:[%s0] sm:$0xff]
    %v16 = vld [vmem:[%s0 + $0x8] sm:$0xff]
    %v17 = vld [vmem:[%s1] sm:$0xff]
    %v18 = vld [vmem:[%s1 + $0x8] sm:$0xff]
    %v19 = vld [vmem:[%s1 + $0x10] sm:$0xff]
    %v20 = vld [vmem:[%s1 + $0x18] sm:$0xff]
    %v21 = vld [vmem:[%s1 + $0x20] sm:$0xff]
    %v22 = vld [vmem:[%s1 + $0x28] sm:$0xff]
    %v23 = vld [vmem:[%s1 + $0x30] sm:$0xff]
    %v24 = vld [vmem:[%s1 + $0x38] sm:$0xff]
    %v25 = vld [vmem:[%s1 + $0x40] sm:$0xff]
    %v26 = vld [vmem:[%s1 + $0x48] sm:$0xff]
    %v27 = vld [vmem:[%s1 + $0x50] sm:$0xff]
    %v28 = vld [vmem:[%s1 + $0x58] sm:$0xff]
    %v29 = vld [vmem:[%s1 + $0x60] sm:$0xff]
    %v30 = vld [vmem:[%s1 + $0x68] sm:$0xff]
    %v31 = vld [vmem:[%s1 + $0x70] sm:$0xff]
    %v32 = vld [vmem:[%s1 + $0x78] sm:$0xff]
    %v33 = vld [vmem:[%s2] sm:$0x1]
    %v35 = vlaneseq
    %v36 = vshrl.u32 %v35, 7
    %v37 = vsub.s32 0, %v36
    %v38 = vrot.slane %v33, %v37
    %40 = vmatprep.subr.mxu0 0.0
    %41 = vmatpush1.msra.mxu0 %v17
    %42 = vmatprep.subr.mxu0 0.0
    %43 = vmatpush1.msra.mxu0 %v18
    %44 = vmatprep.subr.mxu0 0.0
    %45 = vmatpush1.msra.mxu0 %v19
    %46 = vmatprep.subr.mxu0 0.0
    %47 = vmatpush1.msra.mxu0 %v20
    %48 = vmatprep.subr.mxu0 0.0
    %49 = vmatpush1.msra.mxu0 %v21
    %50 = vmatprep.subr.mxu0 0.0
    %51 = vmatpush1.msra.mxu0 %v22
    %52 = vmatprep.subr.mxu0 0.0
    %53 = vmatpush1.msra.mxu0 %v23
    %54 = vmatprep.subr.mxu0 0.0
    %55 = vmatpush1.msra.mxu0 %v24
    %56 = vmatprep.subr.mxu0 0.0
    %57 = vmatpush1.msra.mxu0 %v25
    %58 = vmatprep.subr.mxu0 0.0
    %59 = vmatpush1.msra.mxu0 %v26
    %60 = vmatprep.subr.mxu0 0.0
    %61 = vmatpush1.msra.mxu0 %v27
    %62 = vmatprep.subr.mxu0 0.0
    %63 = vmatpush1.msra.mxu0 %v28
    %64 = vmatprep.subr.mxu0 0.0
    %65 = vmatpush1.msra.mxu0 %v29
    %66 = vmatprep.subr.mxu0 0.0
    %67 = vmatpush1.msra.mxu0 %v30
    %68 = vmatprep.subr.mxu0 0.0
    %69 = vmatpush1.msra.mxu0 %v31
    %70 = vmatprep.subr.mxu0 0.0
    %71 = vmatpush1.msra.mxu0 %v32
    %72 = vmatprep.subr.mxu0 0.0
    %73 = vmatpush1.msra.mxu0 0.0
    %74 = vmatprep.subr.mxu0 0.0
    %75 = vmatpush1.msra.mxu0 0.0
    %76 = vmatprep.subr.mxu0 0.0
    %77 = vmatpush1.msra.mxu0 0.0
    %78 = vmatprep.subr.mxu0 0.0
    %79 = vmatpush1.msra.mxu0 0.0
    %80 = vmatprep.subr.mxu0 0.0
    %81 = vmatpush1.msra.mxu0 0.0
    %82 = vmatprep.subr.mxu0 0.0
    %83 = vmatpush1.msra.mxu0 0.0
    %84 = vmatprep.subr.mxu0 0.0
    %85 = vmatpush1.msra.mxu0 0.0
    %86 = vmatprep.subr.mxu0 0.0
    %87 = vmatpush1.msra.mxu0 0.0
    %88 = vmatprep.subr.mxu0 0.0
    %89 = vmatpush1.msra.mxu0 0.0
    %90 = vmatprep.subr.mxu0 0.0
    %91 = vmatpush1.msra.mxu0 0.0
    %92 = vmatprep.subr.mxu0 0.0
    %93 = vmatpush1.msra.mxu0 0.0
    %94 = vmatprep.subr.mxu0 0.0
    %95 = vmatpush1.msra.mxu0 0.0
    %96 = vmatprep.subr.mxu0 0.0
    %97 = vmatpush1.msra.mxu0 0.0
    %98 = vmatprep.subr.mxu0 0.0
    %99 = vmatpush1.msra.mxu0 0.0
    %100 = vmatprep.subr.mxu0 0.0
    %101 = vmatpush1.msra.mxu0 0.0
    %102 = vmatprep.subr.mxu0 0.0
    %103 = vmatpush1.msra.mxu0 0.0
    %104 = vmatprep.mubr.f32.mxu0 0.0
    %105 = vmatmul.mubr.f32.gmra.mrb[0].mxu0 %v15
    %v106 = vpop.f32.mrb[0].mxu0
    %v107 = vadd.f32 %v38, %v106
    %v108 = vpop.f32.mrb[0].mxu0
    %109 = vmatprep.mubr.f32.mxu0 0.0
    %110 = vmatmul.mubr.f32.gmra.mrb[0].mxu0 %v16
    %v111 = vpop.f32.mrb[0].mxu0
    %v112 = vadd.f32 %v38, %v111
    %v113 = vpop.f32.mrb[0].mxu0
    %114 = vdwg.mxu0
    %115 = vst [vmem:[#allocation2] sm:$0xff] %v107
    %116 = vst [vmem:[#allocation2 + $0x8] sm:$0xff] %v112
    // Predicated region
    $region14: #{modified_attention_transformer.3} parent=1 // pred_check
      _
    $region15: #{modified_attention_transformer.3} parent=1 // pred_check_branch
      %118 = sbr.rel (0) target = $region17
    $region16: #{modified_attention_transformer.3} parent=1 // pred_region
      %s120 = ssub.s32 256, 256
      %121 = vsyncadd [#allocation3], %s120
      %s122 = sshll.u32 [#allocation2], 4
      %s123 = int_to_ptr.vmem [resolvable:$true] %s122
      %128 = dma.vmem_to_hbm [thread:$0]  %s123, 256, %s3, [#allocation3], 128, 128, 8
    $region17: #{modified_attention_transformer.3} parent=1 // pred_fallthru
      _
    // Predicated region
    $region18: #{modified_attention_transformer.3} parent=1 // pred_check
      _
    $region19: #{modified_attention_transformer.3} parent=1 // pred_check_branch
      %130 = sbr.rel (0) target = $region21
    $region20: #{modified_attention_transformer.3} parent=1 // pred_region
      %131 = dma.done [#allocation3], 256
    $region21: #{modified_attention_transformer.3} parent=1 // pred_fallthru
      _
    %132 = vsyncpa [#allocation3], 1

// kernel: modified_attention_transformer.2
$region0: #{modified_attention_transformer.2}
  #allocation0 [shape = 'u32[]', space=smem, size = 0x4, offset = 0x4, fixed_abs, tag = 'smem constant byte address 0x4 - core index']
  #allocation1 [shape = 'u32[144,128]{1,0:T(1,128)}', space=vmem, size = 0x12000, scoped, tag = 'internal scratch']
  %s0 = inlined_call_operand.vmem [shape: f32[16,128], index: 0, kind: input, shape index: {}]
  %s1 = inlined_call_operand.vmem [shape: f32[128,16], index: 1, kind: input, shape index: {}]
  %s2 = inlined_call_operand.vmem [shape: f32[16,16], index: 2, kind: input, shape index: {}]
  %s3 = inlined_call_operand.vmem [shape: f32[128,100], index: 3, kind: input, shape index: {}]
  %s4 = inlined_call_operand.vmem [shape: f32[1,100], index: 4, kind: input, shape index: {}]
  %s5 = inlined_call_operand.vmem [shape: f32[4,128], index: 5, kind: input, shape index: {}]
  %s6 = inlined_call_operand.vmem [shape: f32[4,1], index: 6, kind: input, shape index: {}]
  %s7 = inlined_call_operand.vmem [shape: f32[32,128], index: 7, kind: input, shape index: {}]
  %s8 = inlined_call_operand.vmem [shape: f32[16,128], index: 8, kind: output, shape index: {}]
  %s9 = sld [smem:[#allocation0]]
  $region42: #{modified_attention_transformer.2} parent=0
    _
  %s11 = ssub.s32 1, %s9
  %s12 = scalar_select 0, %s11, %s9
  // Predicated region
  $region2: #{modified_attention_transformer.2} parent=0 // pred_check
    _
  $region3: #{modified_attention_transformer.2} parent=0 // pred_check_branch
    %14 = sbr.rel (0) target = $region5
  $region4: #{modified_attention_transformer.2} parent=0 // pred_region
    _
  $region5: #{modified_attention_transformer.2} parent=0 // pred_fallthru
    _
  // Predicated region
  $region6: #{modified_attention_transformer.2} parent=0 // pred_check
    _
  $region7: #{modified_attention_transformer.2} parent=0 // pred_check_branch
    %16 = sbr.rel (0) target = $region9
  $region8: #{modified_attention_transformer.2} parent=0 // pred_region
    _
  $region9: #{modified_attention_transformer.2} parent=0 // pred_fallthru
    _
  // Predicated region
  $region10: #{modified_attention_transformer.2} parent=0 // pred_check
    _
  $region11: #{modified_attention_transformer.2} parent=0 // pred_check_branch
    %18 = sbr.rel (0) target = $region13
  $region12: #{modified_attention_transformer.2} parent=0 // pred_region
    _
  $region13: #{modified_attention_transformer.2} parent=0 // pred_fallthru
    _
  // Predicated region
  $region14: #{modified_attention_transformer.2} parent=0 // pred_check
    _
  $region15: #{modified_attention_transformer.2} parent=0 // pred_check_branch
    %20 = sbr.rel (0) target = $region17
  $region16: #{modified_attention_transformer.2} parent=0 // pred_region
    _
  $region17: #{modified_attention_transformer.2} parent=0 // pred_fallthru
    _
  // Predicated region
  $region18: #{modified_attention_transformer.2} parent=0 // pred_check
    _
  $region19: #{modified_attention_transformer.2} parent=0 // pred_check_branch
    %22 = sbr.rel (0) target = $region21
  $region20: #{modified_attention_transformer.2} parent=0 // pred_region
    _
  $region21: #{modified_attention_transformer.2} parent=0 // pred_fallthru
    _
  // Predicated region
  $region22: #{modified_attention_transformer.2} parent=0 // pred_check
    _
  $region23: #{modified_attention_transformer.2} parent=0 // pred_check_branch
    %24 = sbr.rel (0) target = $region25
  $region24: #{modified_attention_transformer.2} parent=0 // pred_region
    _
  $region25: #{modified_attention_transformer.2} parent=0 // pred_fallthru
    _
  // Predicated region
  $region26: #{modified_attention_transformer.2} parent=0 // pred_check
    _
  $region27: #{modified_attention_transformer.2} parent=0 // pred_check_branch
    %26 = sbr.rel (0) target = $region29
  $region28: #{modified_attention_transformer.2} parent=0 // pred_region
    _
  $region29: #{modified_attention_transformer.2} parent=0 // pred_fallthru
    _
  // Predicated region
  $region30: #{modified_attention_transformer.2} parent=0 // pred_check
    _
  $region31: #{modified_attention_transformer.2} parent=0 // pred_check_branch
    %28 = sbr.rel (0) target = $region33
  $region32: #{modified_attention_transformer.2} parent=0 // pred_region
    _
  $region33: #{modified_attention_transformer.2} parent=0 // pred_fallthru
    _
  %v29 = vld [vmem:[%s0] sm:$0xff]
  %v30 = vld [vmem:[%s0 + $0x8] sm:$0xff]
  %v31 = vld [vmem:[%s3] sm:$0xff]
  %v32 = vld [vmem:[%s3 + $0x8] sm:$0xff]
  %v33 = vld [vmem:[%s3 + $0x10] sm:$0xff]
  %v34 = vld [vmem:[%s3 + $0x18] sm:$0xff]
  %v35 = vld [vmem:[%s3 + $0x20] sm:$0xff]
  %v36 = vld [vmem:[%s3 + $0x28] sm:$0xff]
  %v37 = vld [vmem:[%s3 + $0x30] sm:$0xff]
  %v38 = vld [vmem:[%s3 + $0x38] sm:$0xff]
  %v39 = vld [vmem:[%s3 + $0x40] sm:$0xff]
  %v40 = vld [vmem:[%s3 + $0x48] sm:$0xff]
  %v41 = vld [vmem:[%s3 + $0x50] sm:$0xff]
  %v42 = vld [vmem:[%s3 + $0x58] sm:$0xff]
  %v43 = vld [vmem:[%s3 + $0x60] sm:$0xff]
  %v44 = vld [vmem:[%s3 + $0x68] sm:$0xff]
  %v45 = vld [vmem:[%s3 + $0x70] sm:$0xff]
  %v46 = vld [vmem:[%s3 + $0x78] sm:$0xff]
  %v47 = vld [vmem:[%s4] sm:$0x1]
  %v49 = vlaneseq
  %v50 = vshrl.u32 %v49, 7
  %v51 = vsub.s32 0, %v50
  %v52 = vrot.slane %v47, %v51
  %54 = vmatprep.subr.mxu0 0.0
  %55 = vmatpush1.msra.mxu0 %v31
  %56 = vmatprep.subr.mxu0 0.0
  %57 = vmatpush1.msra.mxu0 %v32
  %58 = vmatprep.subr.mxu0 0.0
  %59 = vmatpush1.msra.mxu0 %v33
  %60 = vmatprep.subr.mxu0 0.0
  %61 = vmatpush1.msra.mxu0 %v34
  %62 = vmatprep.subr.mxu0 0.0
  %63 = vmatpush1.msra.mxu0 %v35
  %64 = vmatprep.subr.mxu0 0.0
  %65 = vmatpush1.msra.mxu0 %v36
  %66 = vmatprep.subr.mxu0 0.0
  %67 = vmatpush1.msra.mxu0 %v37
  %68 = vmatprep.subr.mxu0 0.0
  %69 = vmatpush1.msra.mxu0 %v38
  %70 = vmatprep.subr.mxu0 0.0
  %71 = vmatpush1.msra.mxu0 %v39
  %72 = vmatprep.subr.mxu0 0.0
  %73 = vmatpush1.msra.mxu0 %v40
  %74 = vmatprep.subr.mxu0 0.0
  %75 = vmatpush1.msra.mxu0 %v41
  %76 = vmatprep.subr.mxu0 0.0
  %77 = vmatpush1.msra.mxu0 %v42
  %78 = vmatprep.subr.mxu0 0.0
  %79 = vmatpush1.msra.mxu0 %v43
  %80 = vmatprep.subr.mxu0 0.0
  %81 = vmatpush1.msra.mxu0 %v44
  %82 = vmatprep.subr.mxu0 0.0
  %83 = vmatpush1.msra.mxu0 %v45
  %84 = vmatprep.subr.mxu0 0.0
  %85 = vmatpush1.msra.mxu0 %v46
  %86 = vmatprep.subr.mxu0 0.0
  %87 = vmatpush1.msra.mxu0 0.0
  %88 = vmatprep.subr.mxu0 0.0
  %89 = vmatpush1.msra.mxu0 0.0
  %90 = vmatprep.subr.mxu0 0.0
  %91 = vmatpush1.msra.mxu0 0.0
  %92 = vmatprep.subr.mxu0 0.0
  %93 = vmatpush1.msra.mxu0 0.0
  %94 = vmatprep.subr.mxu0 0.0
  %95 = vmatpush1.msra.mxu0 0.0
  %96 = vmatprep.subr.mxu0 0.0
  %97 = vmatpush1.msra.mxu0 0.0
  %98 = vmatprep.subr.mxu0 0.0
  %99 = vmatpush1.msra.mxu0 0.0
  %100 = vmatprep.subr.mxu0 0.0
  %101 = vmatpush1.msra.mxu0 0.0
  %102 = vmatprep.subr.mxu0 0.0
  %103 = vmatpush1.msra.mxu0 0.0
  %104 = vmatprep.subr.mxu0 0.0
  %105 = vmatpush1.msra.mxu0 0.0
  %106 = vmatprep.subr.mxu0 0.0
  %107 = vmatpush1.msra.mxu0 0.0
  %108 = vmatprep.subr.mxu0 0.0
  %109 = vmatpush1.msra.mxu0 0.0
  %110 = vmatprep.subr.mxu0 0.0
  %111 = vmatpush1.msra.mxu0 0.0
  %112 = vmatprep.subr.mxu0 0.0
  %113 = vmatpush1.msra.mxu0 0.0
  %114 = vmatprep.subr.mxu0 0.0
  %115 = vmatpush1.msra.mxu0 0.0
  %116 = vmatprep.subr.mxu0 0.0
  %117 = vmatpush1.msra.mxu0 0.0
  %118 = vmatprep.mubr.f32.mxu0 0.0
  %119 = vmatmul.mubr.f32.gmra.mrb[0].mxu0 %v29
  %v120 = vpop.f32.mrb[0].mxu0
  %v121 = vadd.f32 %v52, %v120
  %v122 = vpop.f32.mrb[0].mxu0
  %123 = vmatprep.mubr.f32.mxu0 0.0
  %124 = vmatmul.mubr.f32.gmra.mrb[0].mxu0 %v30
  %v125 = vpop.f32.mrb[0].mxu0
  %v126 = vadd.f32 %v52, %v125
  %v127 = vpop.f32.mrb[0].mxu0
  %128 = vdwg.mxu0
  %v129 = vld [vmem:[%s5] sm:$0xf]
  %v130 = vld [vmem:[%s1] sm:$0xff]
  %v131 = vld [vmem:[%s1 + $0x8] sm:$0xff]
  %v132 = vld [vmem:[%s1 + $0x10] sm:$0xff]
  %v133 = vld [vmem:[%s1 + $0x18] sm:$0xff]
  %v134 = vld [vmem:[%s1 + $0x20] sm:$0xff]
  %v135 = vld [vmem:[%s1 + $0x28] sm:$0xff]
  %v136 = vld [vmem:[%s1 + $0x30] sm:$0xff]
  %v137 = vld [vmem:[%s1 + $0x38] sm:$0xff]
  %v138 = vld [vmem:[%s1 + $0x40] sm:$0xff]
  %v139 = vld [vmem:[%s1 + $0x48] sm:$0xff]
  %v140 = vld [vmem:[%s1 + $0x50] sm:$0xff]
  %v141 = vld [vmem:[%s1 + $0x58] sm:$0xff]
  %v142 = vld [vmem:[%s1 + $0x60] sm:$0xff]
  %v143 = vld [vmem:[%s1 + $0x68] sm:$0xff]
  %v144 = vld [vmem:[%s1 + $0x70] sm:$0xff]
  %v145 = vld [vmem:[%s1 + $0x78] sm:$0xff]
  %v146 = vld [vmem:[%s6] sm:$0xf]
  %148 = vset.pattern.permute.xlu0 0
  %149 = vperm.xlu0 %148, %v146
  %v150 = vpop.permute.xlu0 %149
  %152 = vmatprep.subr.mxu0 0.0
  %153 = vmatpush1.msra.mxu0 %v130
  %154 = vmatprep.subr.mxu0 0.0
  %155 = vmatpush1.msra.mxu0 %v131
  %156 = vmatprep.subr.mxu0 0.0
  %157 = vmatpush1.msra.mxu0 %v132
  %158 = vmatprep.subr.mxu0 0.0
  %159 = vmatpush1.msra.mxu0 %v133
  %160 = vmatprep.subr.mxu0 0.0
  %161 = vmatpush1.msra.mxu0 %v134
  %162 = vmatprep.subr.mxu0 0.0
  %163 = vmatpush1.msra.mxu0 %v135
  %164 = vmatprep.subr.mxu0 0.0
  %165 = vmatpush1.msra.mxu0 %v136
  %166 = vmatprep.subr.mxu0 0.0
  %167 = vmatpush1.msra.mxu0 %v137
  %168 = vmatprep.subr.mxu0 0.0
  %169 = vmatpush1.msra.mxu0 %v138
  %170 = vmatprep.subr.mxu0 0.0
  %171 = vmatpush1.msra.mxu0 %v139
  %172 = vmatprep.subr.mxu0 0.0
  %173 = vmatpush1.msra.mxu0 %v140
  %174 = vmatprep.subr.mxu0 0.0
  %175 = vmatpush1.msra.mxu0 %v141
  %176 = vmatprep.subr.mxu0 0.0
  %177 = vmatpush1.msra.mxu0 %v142
  %178 = vmatprep.subr.mxu0 0.0
  %179 = vmatpush1.msra.mxu0 %v143
  %180 = vmatprep.subr.mxu0 0.0
  %181 = vmatpush1.msra.mxu0 %v144
  %182 = vmatprep.subr.mxu0 0.0
  %183 = vmatpush1.msra.mxu0 %v145
  %184 = vmatprep.subr.mxu0 0.0
  %185 = vmatpush1.msra.mxu0 0.0
  %186 = vmatprep.subr.mxu0 0.0
  %187 = vmatpush1.msra.mxu0 0.0
  %188 = vmatprep.subr.mxu0 0.0
  %189 = vmatpush1.msra.mxu0 0.0
  %190 = vmatprep.subr.mxu0 0.0
  %191 = vmatpush1.msra.mxu0 0.0
  %192 = vmatprep.subr.mxu0 0.0
  %193 = vmatpush1.msra.mxu0 0.0
  %194 = vmatprep.subr.mxu0 0.0
  %195 = vmatpush1.msra.mxu0 0.0
  %196 = vmatprep.subr.mxu0 0.0
  %197 = vmatpush1.msra.mxu0 0.0
  %198 = vmatprep.subr.mxu0 0.0
  %199 = vmatpush1.msra.mxu0 0.0
  %200 = vmatprep.subr.mxu0 0.0
  %201 = vmatpush1.msra.mxu0 0.0
  %202 = vmatprep.subr.mxu0 0.0
  %203 = vmatpush1.msra.mxu0 0.0
  %204 = vmatprep.subr.mxu0 0.0
  %205 = vmatpush1.msra.mxu0 0.0
  %206 = vmatprep.subr.mxu0 0.0
  %207 = vmatpush1.msra.mxu0 0.0
  %208 = vmatprep.subr.mxu0 0.0
  %209 = vmatpush1.msra.mxu0 0.0
  %210 = vmatprep.subr.mxu0 0.0
  %211 = vmatpush1.msra.mxu0 0.0
  %212 = vmatprep.subr.mxu0 0.0
  %213 = vmatpush1.msra.mxu0 0.0
  %214 = vmatprep.subr.mxu0 0.0
  %215 = vmatpush1.msra.mxu0 0.0
  %216 = vmatprep.mubr.f32.mxu0 0.0
  %217 = vmatmul.mubr.f32.gmra.mrb[0].mxu0 %v129
  %v218 = vpop.f32.mrb[0].mxu0
  %v219 = vadd.f32 %v150, %v218
  %v220 = vpop.f32.mrb[0].mxu0
  %221 = vdwg.mxu0
  %v222 = vld [vmem:[%s2] sm:$0xff]
  %v223 = vld [vmem:[%s2 + $0x8] sm:$0xff]
  %226 = vrot.lane.b32.xlu0 %v121, 96
  %v227 = vpop.permute.xlu0 %226
  %228 = vrot.lane.b32.xlu0 %v126, 96
  %v229 = vpop.permute.xlu0 %228
  %vm230 = vcmask 64512
  %v231 = vsel %vm230, %v121, 0
  %v233 = vsel %vm230, %v126, 0
  %v235 = vsel %vm230, %v227, 0
  %v237 = vsel %vm230, %v229, 0
  %239 = vmatprep.subr.mxu0 0.0
  %240 = vmatpush1.xpose.msra.mxu0 %v235
  %241 = vmatprep.subr.mxu0 0.0
  %242 = vmatpush1.xpose.msra.mxu0 %v237
  %243 = vmatprep.subr.mxu0 0.0
  %244 = vmatpush1.xpose.msra.mxu0 0.0
  %245 = vmatprep.subr.mxu0 0.0
  %246 = vmatpush1.xpose.msra.mxu0 0.0
  %247 = vmatprep.subr.mxu0 0.0
  %248 = vmatpush1.xpose.msra.mxu0 0.0
  %249 = vmatprep.subr.mxu0 0.0
  %250 = vmatpush1.xpose.msra.mxu0 0.0
  %251 = vmatprep.subr.mxu0 0.0
  %252 = vmatpush1.xpose.msra.mxu0 0.0
  %253 = vmatprep.subr.mxu0 0.0
  %254 = vmatpush1.xpose.msra.mxu0 0.0
  %255 = vmatprep.subr.mxu0 0.0
  %256 = vmatpush1.xpose.msra.mxu0 0.0
  %257 = vmatprep.subr.mxu0 0.0
  %258 = vmatpush1.xpose.msra.mxu0 0.0
  %259 = vmatprep.subr.mxu0 0.0
  %260 = vmatpush1.xpose.msra.mxu0 0.0
  %261 = vmatprep.subr.mxu0 0.0
  %262 = vmatpush1.xpose.msra.mxu0 0.0
  %263 = vmatprep.subr.mxu0 0.0
  %264 = vmatpush1.xpose.msra.mxu0 0.0
  %265 = vmatprep.subr.mxu0 0.0
  %266 = vmatpush1.xpose.msra.mxu0 0.0
  %267 = vmatprep.subr.mxu0 0.0
  %268 = vmatpush1.xpose.msra.mxu0 0.0
  %269 = vmatprep.subr.mxu0 0.0
  %270 = vmatpush1.xpose.msra.mxu0 0.0
  %271 = vmatprep.subr.mxu0 0.0
  %272 = vmatpush1.xpose.msra.mxu0 0.0
  %273 = vmatprep.subr.mxu0 0.0
  %274 = vmatpush1.xpose.msra.mxu0 0.0
  %275 = vmatprep.subr.mxu0 0.0
  %276 = vmatpush1.xpose.msra.mxu0 0.0
  %277 = vmatprep.subr.mxu0 0.0
  %278 = vmatpush1.xpose.msra.mxu0 0.0
  %279 = vmatprep.subr.mxu0 0.0
  %280 = vmatpush1.xpose.msra.mxu0 0.0
  %281 = vmatprep.subr.mxu0 0.0
  %282 = vmatpush1.xpose.msra.mxu0 0.0
  %283 = vmatprep.subr.mxu0 0.0
  %284 = vmatpush1.xpose.msra.mxu0 0.0
  %285 = vmatprep.subr.mxu0 0.0
  %286 = vmatpush1.xpose.msra.mxu0 0.0
  %287 = vmatprep.subr.mxu0 0.0
  %288 = vmatpush1.xpose.msra.mxu0 0.0
  %289 = vmatprep.subr.mxu0 0.0
  %290 = vmatpush1.xpose.msra.mxu0 0.0
  %291 = vmatprep.subr.mxu0 0.0
  %292 = vmatpush1.xpose.msra.mxu0 0.0
  %293 = vmatprep.subr.mxu0 0.0
  %294 = vmatpush1.xpose.msra.mxu0 0.0
  %295 = vmatprep.subr.mxu0 0.0
  %296 = vmatpush1.xpose.msra.mxu0 0.0
  %297 = vmatprep.subr.mxu0 0.0
  %298 = vmatpush1.xpose.msra.mxu0 0.0
  %299 = vmatprep.subr.mxu0 0.0
  %300 = vmatpush1.xpose.msra.mxu0 0.0
  %301 = vmatprep.subr.mxu0 0.0
  %302 = vmatpush1.xpose.msra.mxu0 0.0
  %303 = vmatprep.mubr.f32.mxu0 0.0
  %304 = vmatmul.mubr.f32.gmra.mrb[0].mxu0 %v231
  %v305 = vpop.f32.mrb[0].mxu0
  %v306 = vadd.f32 0.0, %v305
  %v307 = vpop.f32.mrb[0].mxu0
  %308 = vmatprep.mubr.f32.mxu0 0.0
  %309 = vmatmul.mubr.f32.gmra.mrb[0].mxu0 %v233
  %v310 = vpop.f32.mrb[0].mxu0
  %v311 = vadd.f32 0.0, %v310
  %v312 = vpop.f32.mrb[0].mxu0
  %313 = vdwg.mxu0
  %v314 = vmul.f32 %v306, 0.35355338
  %v315 = vmul.f32 %v311, 0.35355338
  %v316 = vadd.f32 %v314, %v222
  %v317 = vadd.f32 %v315, %v223
  %vm318 = vcmask 130048
  %v319 = vsel %vm318, %v316, -inf
  %320 = vmax.xlane.f32.xlu0 %v319
  %v321 = vpop.xlane.xlu0 %320
  %v322 = vsel %vm318, %v317, -inf
  %323 = vmax.xlane.f32.xlu0 %v322
  %v324 = vpop.xlane.xlu0 %323
  %v325 = vsub.f32 %v316, %v321
  %v326 = vsub.f32 %v317, %v324
  %v327 = vmul.f32 %v325, 1.442695
  %v328 = vpow.pop %v327
  %v329 = vmul.f32 %v326, 1.442695
  %v330 = vpow.pop %v329
  %v331 = vsel %vm318, %v328, 0.0
  %332 = vadd.xlane.f32.xlu0 %v331
  %v333 = vpop.xlane.xlu0 %332
  %v334 = vsel %vm318, %v330, 0.0
  %335 = vadd.xlane.f32.xlu0 %v334
  %v336 = vpop.xlane.xlu0 %335
  %v337 = vrcp.pop %v333
  %v338 = vmul.f32 %v328, %v337
  %v339 = vrcp.pop %v336
  %v340 = vmul.f32 %v330, %v339
  %341 = vset.pattern.permute.xlu0 96
  %342 = vperm.xlu0 %341, %v121
  %v343 = vpop.permute.xlu0 %342
  %345 = vset.pattern.permute.xlu0 96
  %346 = vperm.xlu0 %345, %v126
  %v347 = vpop.permute.xlu0 %346
  %v349 = vlaneseq
  %v350 = vshrl.u32 %v349, 7
  %v351 = vsub.s32 0, %v350
  %v352 = vrot.slane %v219, %v351
  %v353 = vmul.f32 %v343, %v352
  %v354 = vmul.f32 %v347, %v352
  %v355 = vmax.f32 %v353, 0.0
  %v356 = vmax.f32 %v354, 0.0
  %v357 = vmin.f32 %v355, 1.0
  %v358 = vmin.f32 %v356, 1.0
  %v359 = vmul.f32 %v357, %v338
  %v360 = vmul.f32 %v358, %v340
  %361 = vrot.lane.b32.xlu0 %v121, 64
  %v362 = vpop.permute.xlu0 %361
  %363 = vrot.lane.b32.xlu0 %v126, 64
  %v364 = vpop.permute.xlu0 %363
  %v368 = vsel %vm318, %v359, 0
  %v371 = vsel %vm318, %v360, 0
  %373 = vmatprep.subr.mxu0 0.0
  %374 = vmatpush1.msra.mxu0 %v362
  %375 = vmatprep.subr.mxu0 0.0
  %376 = vmatpush1.msra.mxu0 %v364
  %377 = vmatprep.subr.mxu0 0.0
  %378 = vmatpush1.msra.mxu0 0.0
  %379 = vmatprep.subr.mxu0 0.0
  %380 = vmatpush1.msra.mxu0 0.0
  %381 = vmatprep.subr.mxu0 0.0
  %382 = vmatpush1.msra.mxu0 0.0
  %383 = vmatprep.subr.mxu0 0.0
  %384 = vmatpush1.msra.mxu0 0.0
  %385 = vmatprep.subr.mxu0 0.0
  %386 = vmatpush1.msra.mxu0 0.0
  %387 = vmatprep.subr.mxu0 0.0
  %388 = vmatpush1.msra.mxu0 0.0
  %389 = vmatprep.subr.mxu0 0.0
  %390 = vmatpush1.msra.mxu0 0.0
  %391 = vmatprep.subr.mxu0 0.0
  %392 = vmatpush1.msra.mxu0 0.0
  %393 = vmatprep.subr.mxu0 0.0
  %394 = vmatpush1.msra.mxu0 0.0
  %395 = vmatprep.subr.mxu0 0.0
  %396 = vmatpush1.msra.mxu0 0.0
  %397 = vmatprep.subr.mxu0 0.0
  %398 = vmatpush1.msra.mxu0 0.0
  %399 = vmatprep.subr.mxu0 0.0
  %400 = vmatpush1.msra.mxu0 0.0
  %401 = vmatprep.subr.mxu0 0.0
  %402 = vmatpush1.msra.mxu0 0.0
  %403 = vmatprep.subr.mxu0 0.0
  %404 = vmatpush1.msra.mxu0 0.0
  %405 = vmatprep.subr.mxu0 0.0
  %406 = vmatpush1.msra.mxu0 0.0
  %407 = vmatprep.subr.mxu0 0.0
  %408 = vmatpush1.msra.mxu0 0.0
  %409 = vmatprep.subr.mxu0 0.0
  %410 = vmatpush1.msra.mxu0 0.0
  %411 = vmatprep.subr.mxu0 0.0
  %412 = vmatpush1.msra.mxu0 0.0
  %413 = vmatprep.subr.mxu0 0.0
  %414 = vmatpush1.msra.mxu0 0.0
  %415 = vmatprep.subr.mxu0 0.0
  %416 = vmatpush1.msra.mxu0 0.0
  %417 = vmatprep.subr.mxu0 0.0
  %418 = vmatpush1.msra.mxu0 0.0
  %419 = vmatprep.subr.mxu0 0.0
  %420 = vmatpush1.msra.mxu0 0.0
  %421 = vmatprep.subr.mxu0 0.0
  %422 = vmatpush1.msra.mxu0 0.0
  %423 = vmatprep.subr.mxu0 0.0
  %424 = vmatpush1.msra.mxu0 0.0
  %425 = vmatprep.subr.mxu0 0.0
  %426 = vmatpush1.msra.mxu0 0.0
  %427 = vmatprep.subr.mxu0 0.0
  %428 = vmatpush1.msra.mxu0 0.0
  %429 = vmatprep.subr.mxu0 0.0
  %430 = vmatpush1.msra.mxu0 0.0
  %431 = vmatprep.subr.mxu0 0.0
  %432 = vmatpush1.msra.mxu0 0.0
  %433 = vmatprep.subr.mxu0 0.0
  %434 = vmatpush1.msra.mxu0 0.0
  %435 = vmatprep.subr.mxu0 0.0
  %436 = vmatpush1.msra.mxu0 0.0
  %437 = vmatprep.mubr.f32.mxu0 0.0
  %438 = vmatmul.mubr.f32.gmra.mrb[0].mxu0 %v368
  %v439 = vpop.f32.mrb[0].mxu0
  %v440 = vadd.f32 0.0, %v439
  %v441 = vpop.f32.mrb[0].mxu0
  %442 = vmatprep.mubr.f32.mxu0 0.0
  %443 = vmatmul.mubr.f32.gmra.mrb[0].mxu0 %v371
  %v444 = vpop.f32.mrb[0].mxu0
  %v445 = vadd.f32 0.0, %v444
  %v446 = vpop.f32.mrb[0].mxu0
  %447 = vdwg.mxu0
  %v448 = vld [vmem:[%s7] sm:$0xff]
  %v450 = vsel %vm230, %v440, 0
  %v453 = vsel %vm230, %v445, 0
  %455 = vmatprep.subr.mxu0 0.0
  %456 = vmatpush1.msra.mxu0 %v448
  %457 = vmatprep.subr.mxu0 0.0
  %458 = vmatpush1.msra.mxu0 0.0
  %459 = vmatprep.subr.mxu0 0.0
  %460 = vmatpush1.msra.mxu0 0.0
  %461 = vmatprep.subr.mxu0 0.0
  %462 = vmatpush1.msra.mxu0 0.0
  %463 = vmatprep.subr.mxu0 0.0
  %464 = vmatpush1.msra.mxu0 0.0
  %465 = vmatprep.subr.mxu0 0.0
  %466 = vmatpush1.msra.mxu0 0.0
  %467 = vmatprep.subr.mxu0 0.0
  %468 = vmatpush1.msra.mxu0 0.0
  %469 = vmatprep.subr.mxu0 0.0
  %470 = vmatpush1.msra.mxu0 0.0
  %471 = vmatprep.subr.mxu0 0.0
  %472 = vmatpush1.msra.mxu0 0.0
  %473 = vmatprep.subr.mxu0 0.0
  %474 = vmatpush1.msra.mxu0 0.0
  %475 = vmatprep.subr.mxu0 0.0
  %476 = vmatpush1.msra.mxu0 0.0
  %477 = vmatprep.subr.mxu0 0.0
  %478 = vmatpush1.msra.mxu0 0.0
  %479 = vmatprep.subr.mxu0 0.0
  %480 = vmatpush1.msra.mxu0 0.0
  %481 = vmatprep.subr.mxu0 0.0
  %482 = vmatpush1.msra.mxu0 0.0
  %483 = vmatprep.subr.mxu0 0.0
  %484 = vmatpush1.msra.mxu0 0.0
  %485 = vmatprep.subr.mxu0 0.0
  %486 = vmatpush1.msra.mxu0 0.0
  %487 = vmatprep.subr.mxu0 0.0
  %488 = vmatpush1.msra.mxu0 0.0
  %489 = vmatprep.subr.mxu0 0.0
  %490 = vmatpush1.msra.mxu0 0.0
  %491 = vmatprep.subr.mxu0 0.0
  %492 = vmatpush1.msra.mxu0 0.0
  %493 = vmatprep.subr.mxu0 0.0
  %494 = vmatpush1.msra.mxu0 0.0
  %495 = vmatprep.subr.mxu0 0.0
  %496 = vmatpush1.msra.mxu0 0.0
  %497 = vmatprep.subr.mxu0 0.0
  %498 = vmatpush1.msra.mxu0 0.0
  %499 = vmatprep.subr.mxu0 0.0
  %500 = vmatpush1.msra.mxu0 0.0
  %501 = vmatprep.subr.mxu0 0.0
  %502 = vmatpush1.msra.mxu0 0.0
  %503 = vmatprep.subr.mxu0 0.0
  %504 = vmatpush1.msra.mxu0 0.0
  %505 = vmatprep.subr.mxu0 0.0
  %506 = vmatpush1.msra.mxu0 0.0
  %507 = vmatprep.subr.mxu0 0.0
  %508 = vmatpush1.msra.mxu0 0.0
  %509 = vmatprep.subr.mxu0 0.0
  %510 = vmatpush1.msra.mxu0 0.0
  %511 = vmatprep.subr.mxu0 0.0
  %512 = vmatpush1.msra.mxu0 0.0
  %513 = vmatprep.subr.mxu0 0.0
  %514 = vmatpush1.msra.mxu0 0.0
  %515 = vmatprep.subr.mxu0 0.0
  %516 = vmatpush1.msra.mxu0 0.0
  %517 = vmatprep.subr.mxu0 0.0
  %518 = vmatpush1.msra.mxu0 0.0
  %519 = vmatprep.mubr.f32.mxu0 0.0
  %520 = vmatmul.mubr.f32.gmra.mrb[0].mxu0 %v450
  %v521 = vpop.f32.mrb[0].mxu0
  %v522 = vadd.f32 0.0, %v521
  %v523 = vpop.f32.mrb[0].mxu0
  %524 = vmatprep.mubr.f32.mxu0 0.0
  %525 = vmatmul.mubr.f32.gmra.mrb[0].mxu0 %v453
  %v526 = vpop.f32.mrb[0].mxu0
  %v527 = vadd.f32 0.0, %v526
  %v528 = vpop.f32.mrb[0].mxu0
  %529 = vdwg.mxu0
  %v530 = vadd.f32 %v29, %v522
  %v531 = vadd.f32 %v30, %v527
  %532 = vrot.lane.b32.xlu0 %v121, 120
  %v533 = vpop.permute.xlu0 %532
  %534 = vrot.lane.b32.xlu0 %v126, 120
  %v535 = vpop.permute.xlu0 %534
  %536 = vrot.lane.b32.xlu0 %v121, 88
  %v537 = vpop.permute.xlu0 %536
  %538 = vrot.lane.b32.xlu0 %v126, 88
  %v539 = vpop.permute.xlu0 %538
  %v540 = vsel %vm230, %v533, 0
  %v542 = vsel %vm230, %v535, 0
  %v544 = vsel %vm230, %v537, 0
  %v546 = vsel %vm230, %v539, 0
  %548 = vmatprep.subr.mxu0 0.0
  %549 = vmatpush1.xpose.msra.mxu0 %v544
  %550 = vmatprep.subr.mxu0 0.0
  %551 = vmatpush1.xpose.msra.mxu0 %v546
  %552 = vmatprep.subr.mxu0 0.0
  %553 = vmatpush1.xpose.msra.mxu0 0.0
  %554 = vmatprep.subr.mxu0 0.0
  %555 = vmatpush1.xpose.msra.mxu0 0.0
  %556 = vmatprep.subr.mxu0 0.0
  %557 = vmatpush1.xpose.msra.mxu0 0.0
  %558 = vmatprep.subr.mxu0 0.0
  %559 = vmatpush1.xpose.msra.mxu0 0.0
  %560 = vmatprep.subr.mxu0 0.0
  %561 = vmatpush1.xpose.msra.mxu0 0.0
  %562 = vmatprep.subr.mxu0 0.0
  %563 = vmatpush1.xpose.msra.mxu0 0.0
  %564 = vmatprep.subr.mxu0 0.0
  %565 = vmatpush1.xpose.msra.mxu0 0.0
  %566 = vmatprep.subr.mxu0 0.0
  %567 = vmatpush1.xpose.msra.mxu0 0.0
  %568 = vmatprep.subr.mxu0 0.0
  %569 = vmatpush1.xpose.msra.mxu0 0.0
  %570 = vmatprep.subr.mxu0 0.0
  %571 = vmatpush1.xpose.msra.mxu0 0.0
  %572 = vmatprep.subr.mxu0 0.0
  %573 = vmatpush1.xpose.msra.mxu0 0.0
  %574 = vmatprep.subr.mxu0 0.0
  %575 = vmatpush1.xpose.msra.mxu0 0.0
  %576 = vmatprep.subr.mxu0 0.0
  %577 = vmatpush1.xpose.msra.mxu0 0.0
  %578 = vmatprep.subr.mxu0 0.0
  %579 = vmatpush1.xpose.msra.mxu0 0.0
  %580 = vmatprep.subr.mxu0 0.0
  %581 = vmatpush1.xpose.msra.mxu0 0.0
  %582 = vmatprep.subr.mxu0 0.0
  %583 = vmatpush1.xpose.msra.mxu0 0.0
  %584 = vmatprep.subr.mxu0 0.0
  %585 = vmatpush1.xpose.msra.mxu0 0.0
  %586 = vmatprep.subr.mxu0 0.0
  %587 = vmatpush1.xpose.msra.mxu0 0.0
  %588 = vmatprep.subr.mxu0 0.0
  %589 = vmatpush1.xpose.msra.mxu0 0.0
  %590 = vmatprep.subr.mxu0 0.0
  %591 = vmatpush1.xpose.msra.mxu0 0.0
  %592 = vmatprep.subr.mxu0 0.0
  %593 = vmatpush1.xpose.msra.mxu0 0.0
  %594 = vmatprep.subr.mxu0 0.0
  %595 = vmatpush1.xpose.msra.mxu0 0.0
  %596 = vmatprep.subr.mxu0 0.0
  %597 = vmatpush1.xpose.msra.mxu0 0.0
  %598 = vmatprep.subr.mxu0 0.0
  %599 = vmatpush1.xpose.msra.mxu0 0.0
  %600 = vmatprep.subr.mxu0 0.0
  %601 = vmatpush1.xpose.msra.mxu0 0.0
  %602 = vmatprep.subr.mxu0 0.0
  %603 = vmatpush1.xpose.msra.mxu0 0.0
  %604 = vmatprep.subr.mxu0 0.0
  %605 = vmatpush1.xpose.msra.mxu0 0.0
  %606 = vmatprep.subr.mxu0 0.0
  %607 = vmatpush1.xpose.msra.mxu0 0.0
  %608 = vmatprep.subr.mxu0 0.0
  %609 = vmatpush1.xpose.msra.mxu0 0.0
  %610 = vmatprep.subr.mxu0 0.0
  %611 = vmatpush1.xpose.msra.mxu0 0.0
  %612 = vmatprep.mubr.f32.mxu0 0.0
  %613 = vmatmul.mubr.f32.gmra.mrb[0].mxu0 %v540
  %v614 = vpop.f32.mrb[0].mxu0
  %v615 = vadd.f32 0.0, %v614
  %v616 = vpop.f32.mrb[0].mxu0
  %617 = vmatprep.mubr.f32.mxu0 0.0
  %618 = vmatmul.mubr.f32.gmra.mrb[0].mxu0 %v542
  %v619 = vpop.f32.mrb[0].mxu0
  %v620 = vadd.f32 0.0, %v619
  %v621 = vpop.f32.mrb[0].mxu0
  %622 = vdwg.mxu0
  %v623 = vmul.f32 %v615, 0.35355338
  %v624 = vmul.f32 %v620, 0.35355338
  %v625 = vadd.f32 %v623, %v222
  %v626 = vadd.f32 %v624, %v223
  %v627 = vsel %vm318, %v625, -inf
  %628 = vmax.xlane.f32.xlu0 %v627
  %v629 = vpop.xlane.xlu0 %628
  %v630 = vsel %vm318, %v626, -inf
  %631 = vmax.xlane.f32.xlu0 %v630
  %v632 = vpop.xlane.xlu0 %631
  %v633 = vsub.f32 %v625, %v629
  %v634 = vsub.f32 %v626, %v632
  %v635 = vmul.f32 %v633, 1.442695
  %v636 = vpow.pop %v635
  %v637 = vmul.f32 %v634, 1.442695
  %v638 = vpow.pop %v637
  %v639 = vsel %vm318, %v636, 0.0
  %640 = vadd.xlane.f32.xlu0 %v639
  %v641 = vpop.xlane.xlu0 %640
  %v642 = vsel %vm318, %v638, 0.0
  %643 = vadd.xlane.f32.xlu0 %v642
  %v644 = vpop.xlane.xlu0 %643
  %v645 = vrcp.pop %v641
  %v646 = vmul.f32 %v636, %v645
  %v647 = vrcp.pop %v644
  %v648 = vmul.f32 %v638, %v647
  %649 = vset.pattern.permute.xlu0 97
  %650 = vperm.xlu0 %649, %v121
  %v651 = vpop.permute.xlu0 %650
  %653 = vset.pattern.permute.xlu0 97
  %654 = vperm.xlu0 %653, %v126
  %v655 = vpop.permute.xlu0 %654
  %v657 = vlaneseq
  %v658 = vshrl.u32 %v657, 7
  %v659 = vsub.s32 1, %v658
  %v660 = vrot.slane %v219, %v659
  %v661 = vmul.f32 %v651, %v660
  %v662 = vmul.f32 %v655, %v660
  %v663 = vmax.f32 %v661, 0.0
  %v664 = vmax.f32 %v662, 0.0
  %v665 = vmin.f32 %v663, 1.0
  %v666 = vmin.f32 %v664, 1.0
  %v667 = vmul.f32 %v665, %v646
  %v668 = vmul.f32 %v666, %v648
  %669 = vrot.lane.b32.xlu0 %v121, 56
  %v670 = vpop.permute.xlu0 %669
  %671 = vrot.lane.b32.xlu0 %v126, 56
  %v672 = vpop.permute.xlu0 %671
  %v676 = vsel %vm318, %v667, 0
  %v679 = vsel %vm318, %v668, 0
  %681 = vmatprep.subr.mxu0 0.0
  %682 = vmatpush1.msra.mxu0 %v670
  %683 = vmatprep.subr.mxu0 0.0
  %684 = vmatpush1.msra.mxu0 %v672
  %685 = vmatprep.subr.mxu0 0.0
  %686 = vmatpush1.msra.mxu0 0.0
  %687 = vmatprep.subr.mxu0 0.0
  %688 = vmatpush1.msra.mxu0 0.0
  %689 = vmatprep.subr.mxu0 0.0
  %690 = vmatpush1.msra.mxu0 0.0
  %691 = vmatprep.subr.mxu0 0.0
  %692 = vmatpush1.msra.mxu0 0.0
  %693 = vmatprep.subr.mxu0 0.0
  %694 = vmatpush1.msra.mxu0 0.0
  %695 = vmatprep.subr.mxu0 0.0
  %696 = vmatpush1.msra.mxu0 0.0
  %697 = vmatprep.subr.mxu0 0.0
  %698 = vmatpush1.msra.mxu0 0.0
  %699 = vmatprep.subr.mxu0 0.0
  %700 = vmatpush1.msra.mxu0 0.0
  %701 = vmatprep.subr.mxu0 0.0
  %702 = vmatpush1.msra.mxu0 0.0
  %703 = vmatprep.subr.mxu0 0.0
  %704 = vmatpush1.msra.mxu0 0.0
  %705 = vmatprep.subr.mxu0 0.0
  %706 = vmatpush1.msra.mxu0 0.0
  %707 = vmatprep.subr.mxu0 0.0
  %708 = vmatpush1.msra.mxu0 0.0
  %709 = vmatprep.subr.mxu0 0.0
  %710 = vmatpush1.msra.mxu0 0.0
  %711 = vmatprep.subr.mxu0 0.0
  %712 = vmatpush1.msra.mxu0 0.0
  %713 = vmatprep.subr.mxu0 0.0
  %714 = vmatpush1.msra.mxu0 0.0
  %715 = vmatprep.subr.mxu0 0.0
  %716 = vmatpush1.msra.mxu0 0.0
  %717 = vmatprep.subr.mxu0 0.0
  %718 = vmatpush1.msra.mxu0 0.0
  %719 = vmatprep.subr.mxu0 0.0
  %720 = vmatpush1.msra.mxu0 0.0
  %721 = vmatprep.subr.mxu0 0.0
  %722 = vmatpush1.msra.mxu0 0.0
  %723 = vmatprep.subr.mxu0 0.0
  %724 = vmatpush1.msra.mxu0 0.0
  %725 = vmatprep.subr.mxu0 0.0
  %726 = vmatpush1.msra.mxu0 0.0
  %727 = vmatprep.subr.mxu0 0.0
  %728 = vmatpush1.msra.mxu0 0.0
  %729 = vmatprep.subr.mxu0 0.0
  %730 = vmatpush1.msra.mxu0 0.0
  %731 = vmatprep.subr.mxu0 0.0
  %732 = vmatpush1.msra.mxu0 0.0
  %733 = vmatprep.subr.mxu0 0.0
  %734 = vmatpush1.msra.mxu0 0.0
  %735 = vmatprep.subr.mxu0 0.0
  %736 = vmatpush1.msra.mxu0 0.0
  %737 = vmatprep.subr.mxu0 0.0
  %738 = vmatpush1.msra.mxu0 0.0
  %739 = vmatprep.subr.mxu0 0.0
  %740 = vmatpush1.msra.mxu0 0.0
  %741 = vmatprep.subr.mxu0 0.0
  %742 = vmatpush1.msra.mxu0 0.0
  %743 = vmatprep.subr.mxu0 0.0
  %744 = vmatpush1.msra.mxu0 0.0
  %745 = vmatprep.mubr.f32.mxu0 0.0
  %746 = vmatmul.mubr.f32.gmra.mrb[0].mxu0 %v676
  %v747 = vpop.f32.mrb[0].mxu0
  %v748 = vadd.f32 0.0, %v747
  %v749 = vpop.f32.mrb[0].mxu0
  %750 = vmatprep.mubr.f32.mxu0 0.0
  %751 = vmatmul.mubr.f32.gmra.mrb[0].mxu0 %v679
  %v752 = vpop.f32.mrb[0].mxu0
  %v753 = vadd.f32 0.0, %v752
  %v754 = vpop.f32.mrb[0].mxu0
  %755 = vdwg.mxu0
  %v756 = vld [vmem:[%s7 + $0x8] sm:$0xff]
  %v758 = vsel %vm230, %v748, 0
  %v761 = vsel %vm230, %v753, 0
  %763 = vmatprep.subr.mxu0 0.0
  %764 = vmatpush1.msra.mxu0 %v756
  %765 = vmatprep.subr.mxu0 0.0
  %766 = vmatpush1.msra.mxu0 0.0
  %767 = vmatprep.subr.mxu0 0.0
  %768 = vmatpush1.msra.mxu0 0.0
  %769 = vmatprep.subr.mxu0 0.0
  %770 = vmatpush1.msra.mxu0 0.0
  %771 = vmatprep.subr.mxu0 0.0
  %772 = vmatpush1.msra.mxu0 0.0
  %773 = vmatprep.subr.mxu0 0.0
  %774 = vmatpush1.msra.mxu0 0.0
  %775 = vmatprep.subr.mxu0 0.0
  %776 = vmatpush1.msra.mxu0 0.0
  %777 = vmatprep.subr.mxu0 0.0
  %778 = vmatpush1.msra.mxu0 0.0
  %779 = vmatprep.subr.mxu0 0.0
  %780 = vmatpush1.msra.mxu0 0.0
  %781 = vmatprep.subr.mxu0 0.0
  %782 = vmatpush1.msra.mxu0 0.0
  %783 = vmatprep.subr.mxu0 0.0
  %784 = vmatpush1.msra.mxu0 0.0
  %785 = vmatprep.subr.mxu0 0.0
  %786 = vmatpush1.msra.mxu0 0.0
  %787 = vmatprep.subr.mxu0 0.0
  %788 = vmatpush1.msra.mxu0 0.0
  %789 = vmatprep.subr.mxu0 0.0
  %790 = vmatpush1.msra.mxu0 0.0
  %791 = vmatprep.subr.mxu0 0.0
  %792 = vmatpush1.msra.mxu0 0.0
  %793 = vmatprep.subr.mxu0 0.0
  %794 = vmatpush1.msra.mxu0 0.0
  %795 = vmatprep.subr.mxu0 0.0
  %796 = vmatpush1.msra.mxu0 0.0
  %797 = vmatprep.subr.mxu0 0.0
  %798 = vmatpush1.msra.mxu0 0.0
  %799 = vmatprep.subr.mxu0 0.0
  %800 = vmatpush1.msra.mxu0 0.0
  %801 = vmatprep.subr.mxu0 0.0
  %802 = vmatpush1.msra.mxu0 0.0
  %803 = vmatprep.subr.mxu0 0.0
  %804 = vmatpush1.msra.mxu0 0.0
  %805 = vmatprep.subr.mxu0 0.0
  %806 = vmatpush1.msra.mxu0 0.0
  %807 = vmatprep.subr.mxu0 0.0
  %808 = vmatpush1.msra.mxu0 0.0
  %809 = vmatprep.subr.mxu0 0.0
  %810 = vmatpush1.msra.mxu0 0.0
  %811 = vmatprep.subr.mxu0 0.0
  %812 = vmatpush1.msra.mxu0 0.0
  %813 = vmatprep.subr.mxu0 0.0
  %814 = vmatpush1.msra.mxu0 0.0
  %815 = vmatprep.subr.mxu0 0.0
  %816 = vmatpush1.msra.mxu0 0.0
  %817 = vmatprep.subr.mxu0 0.0
  %818 = vmatpush1.msra.mxu0 0.0
  %819 = vmatprep.subr.mxu0 0.0
  %820 = vmatpush1.msra.mxu0 0.0
  %821 = vmatprep.subr.mxu0 0.0
  %822 = vmatpush1.msra.mxu0 0.0
  %823 = vmatprep.subr.mxu0 0.0
  %824 = vmatpush1.msra.mxu0 0.0
  %825 = vmatprep.subr.mxu0 0.0
  %826 = vmatpush1.msra.mxu0 0.0
  %827 = vmatprep.mubr.f32.mxu0 0.0
  %828 = vmatmul.mubr.f32.gmra.mrb[0].mxu0 %v758
  %v829 = vpop.f32.mrb[0].mxu0
  %v830 = vadd.f32 0.0, %v829
  %v831 = vpop.f32.mrb[0].mxu0
  %832 = vmatprep.mubr.f32.mxu0 0.0
  %833 = vmatmul.mubr.f32.gmra.mrb[0].mxu0 %v761
  %v834 = vpop.f32.mrb[0].mxu0
  %v835 = vadd.f32 0.0, %v834
  %v836 = vpop.f32.mrb[0].mxu0
  %837 = vdwg.mxu0
  %v838 = vadd.f32 %v530, %v830
  %v839 = vadd.f32 %v531, %v835
  %840 = vrot.lane.b32.xlu0 %v121, 112
  %v841 = vpop.permute.xlu0 %840
  %842 = vrot.lane.b32.xlu0 %v126, 112
  %v843 = vpop.permute.xlu0 %842
  %844 = vrot.lane.b32.xlu0 %v121, 80
  %v845 = vpop.permute.xlu0 %844
  %846 = vrot.lane.b32.xlu0 %v126, 80
  %v847 = vpop.permute.xlu0 %846
  %v848 = vsel %vm230, %v841, 0
  %v850 = vsel %vm230, %v843, 0
  %v852 = vsel %vm230, %v845, 0
  %v854 = vsel %vm230, %v847, 0
  %856 = vmatprep.subr.mxu0 0.0
  %857 = vmatpush1.xpose.msra.mxu0 %v852
  %858 = vmatprep.subr.mxu0 0.0
  %859 = vmatpush1.xpose.msra.mxu0 %v854
  %860 = vmatprep.subr.mxu0 0.0
  %861 = vmatpush1.xpose.msra.mxu0 0.0
  %862 = vmatprep.subr.mxu0 0.0
  %863 = vmatpush1.xpose.msra.mxu0 0.0
  %864 = vmatprep.subr.mxu0 0.0
  %865 = vmatpush1.xpose.msra.mxu0 0.0
  %866 = vmatprep.subr.mxu0 0.0
  %867 = vmatpush1.xpose.msra.mxu0 0.0
  %868 = vmatprep.subr.mxu0 0.0
  %869 = vmatpush1.xpose.msra.mxu0 0.0
  %870 = vmatprep.subr.mxu0 0.0
  %871 = vmatpush1.xpose.msra.mxu0 0.0
  %872 = vmatprep.subr.mxu0 0.0
  %873 = vmatpush1.xpose.msra.mxu0 0.0
  %874 = vmatprep.subr.mxu0 0.0
  %875 = vmatpush1.xpose.msra.mxu0 0.0
  %876 = vmatprep.subr.mxu0 0.0
  %877 = vmatpush1.xpose.msra.mxu0 0.0
  %878 = vmatprep.subr.mxu0 0.0
  %879 = vmatpush1.xpose.msra.mxu0 0.0
  %880 = vmatprep.subr.mxu0 0.0
  %881 = vmatpush1.xpose.msra.mxu0 0.0
  %882 = vmatprep.subr.mxu0 0.0
  %883 = vmatpush1.xpose.msra.mxu0 0.0
  %884 = vmatprep.subr.mxu0 0.0
  %885 = vmatpush1.xpose.msra.mxu0 0.0
  %886 = vmatprep.subr.mxu0 0.0
  %887 = vmatpush1.xpose.msra.mxu0 0.0
  %888 = vmatprep.subr.mxu0 0.0
  %889 = vmatpush1.xpose.msra.mxu0 0.0
  %890 = vmatprep.subr.mxu0 0.0
  %891 = vmatpush1.xpose.msra.mxu0 0.0
  %892 = vmatprep.subr.mxu0 0.0
  %893 = vmatpush1.xpose.msra.mxu0 0.0
  %894 = vmatprep.subr.mxu0 0.0
  %895 = vmatpush1.xpose.msra.mxu0 0.0
  %896 = vmatprep.subr.mxu0 0.0
  %897 = vmatpush1.xpose.msra.mxu0 0.0
  %898 = vmatprep.subr.mxu0 0.0
  %899 = vmatpush1.xpose.msra.mxu0 0.0
  %900 = vmatprep.subr.mxu0 0.0
  %901 = vmatpush1.xpose.msra.mxu0 0.0
  %902 = vmatprep.subr.mxu0 0.0
  %903 = vmatpush1.xpose.msra.mxu0 0.0
  %904 = vmatprep.subr.mxu0 0.0
  %905 = vmatpush1.xpose.msra.mxu0 0.0
  %906 = vmatprep.subr.mxu0 0.0
  %907 = vmatpush1.xpose.msra.mxu0 0.0
  %908 = vmatprep.subr.mxu0 0.0
  %909 = vmatpush1.xpose.msra.mxu0 0.0
  %910 = vmatprep.subr.mxu0 0.0
  %911 = vmatpush1.xpose.msra.mxu0 0.0
  %912 = vmatprep.subr.mxu0 0.0
  %913 = vmatpush1.xpose.msra.mxu0 0.0
  %914 = vmatprep.subr.mxu0 0.0
  %915 = vmatpush1.xpose.msra.mxu0 0.0
  %916 = vmatprep.subr.mxu0 0.0
  %917 = vmatpush1.xpose.msra.mxu0 0.0
  %918 = vmatprep.subr.mxu0 0.0
  %919 = vmatpush1.xpose.msra.mxu0 0.0
  %920 = vmatprep.mubr.f32.mxu0 0.0
  %921 = vmatmul.mubr.f32.gmra.mrb[0].mxu0 %v848
  %v922 = vpop.f32.mrb[0].mxu0
  %v923 = vadd.f32 0.0, %v922
  %v924 = vpop.f32.mrb[0].mxu0
  %925 = vmatprep.mubr.f32.mxu0 0.0
  %926 = vmatmul.mubr.f32.gmra.mrb[0].mxu0 %v850
  %v927 = vpop.f32.mrb[0].mxu0
  %v928 = vadd.f32 0.0, %v927
  %v929 = vpop.f32.mrb[0].mxu0
  %930 = vdwg.mxu0
  %v931 = vmul.f32 %v923, 0.35355338
  %v932 = vmul.f32 %v928, 0.35355338
  %v933 = vadd.f32 %v931, %v222
  %v934 = vadd.f32 %v932, %v223
  %v935 = vsel %vm318, %v933, -inf
  %936 = vmax.xlane.f32.xlu0 %v935
  %v937 = vpop.xlane.xlu0 %936
  %v938 = vsel %vm318, %v934, -inf
  %939 = vmax.xlane.f32.xlu0 %v938
  %v940 = vpop.xlane.xlu0 %939
  %v941 = vsub.f32 %v933, %v937
  %v942 = vsub.f32 %v934, %v940
  %v943 = vmul.f32 %v941, 1.442695
  %v944 = vpow.pop %v943
  %v945 = vmul.f32 %v942, 1.442695
  %v946 = vpow.pop %v945
  %v947 = vsel %vm318, %v944, 0.0
  %948 = vadd.xlane.f32.xlu0 %v947
  %v949 = vpop.xlane.xlu0 %948
  %v950 = vsel %vm318, %v946, 0.0
  %951 = vadd.xlane.f32.xlu0 %v950
  %v952 = vpop.xlane.xlu0 %951
  %v953 = vrcp.pop %v949
  %v954 = vmul.f32 %v944, %v953
  %v955 = vrcp.pop %v952
  %v956 = vmul.f32 %v946, %v955
  %957 = vset.pattern.permute.xlu0 98
  %958 = vperm.xlu0 %957, %v121
  %v959 = vpop.permute.xlu0 %958
  %961 = vset.pattern.permute.xlu0 98
  %962 = vperm.xlu0 %961, %v126
  %v963 = vpop.permute.xlu0 %962
  %v965 = vlaneseq
  %v966 = vshrl.u32 %v965, 7
  %v967 = vsub.s32 2, %v966
  %v968 = vrot.slane %v219, %v967
  %v969 = vmul.f32 %v959, %v968
  %v970 = vmul.f32 %v963, %v968
  %v971 = vmax.f32 %v969, 0.0
  %v972 = vmax.f32 %v970, 0.0
  %v973 = vmin.f32 %v971, 1.0
  %v974 = vmin.f32 %v972, 1.0
  %v975 = vmul.f32 %v973, %v954
  %v976 = vmul.f32 %v974, %v956
  %977 = vrot.lane.b32.xlu0 %v121, 48
  %v978 = vpop.permute.xlu0 %977
  %979 = vrot.lane.b32.xlu0 %v126, 48
  %v980 = vpop.permute.xlu0 %979
  %v984 = vsel %vm318, %v975, 0
  %v987 = vsel %vm318, %v976, 0
  %989 = vmatprep.subr.mxu0 0.0
  %990 = vmatpush1.msra.mxu0 %v978
  %991 = vmatprep.subr.mxu0 0.0
  %992 = vmatpush1.msra.mxu0 %v980
  %993 = vmatprep.subr.mxu0 0.0
  %994 = vmatpush1.msra.mxu0 0.0
  %995 = vmatprep.subr.mxu0 0.0
  %996 = vmatpush1.msra.mxu0 0.0
  %997 = vmatprep.subr.mxu0 0.0
  %998 = vmatpush1.msra.mxu0 0.0
  %999 = vmatprep.subr.mxu0 0.0
  %1000 = vmatpush1.msra.mxu0 0.0
  %1001 = vmatprep.subr.mxu0 0.0
  %1002 = vmatpush1.msra.mxu0 0.0
  %1003 = vmatprep.subr.mxu0 0.0
  %1004 = vmatpush1.msra.mxu0 0.0
  %1005 = vmatprep.subr.mxu0 0.0
  %1006 = vmatpush1.msra.mxu0 0.0
  %1007 = vmatprep.subr.mxu0 0.0
  %1008 = vmatpush1.msra.mxu0 0.0
  %1009 = vmatprep.subr.mxu0 0.0
  %1010 = vmatpush1.msra.mxu0 0.0
  %1011 = vmatprep.subr.mxu0 0.0
  %1012 = vmatpush1.msra.mxu0 0.0
  %1013 = vmatprep.subr.mxu0 0.0
  %1014 = vmatpush1.msra.mxu0 0.0
  %1015 = vmatprep.subr.mxu0 0.0
  %1016 = vmatpush1.msra.mxu0 0.0
  %1017 = vmatprep.subr.mxu0 0.0
  %1018 = vmatpush1.msra.mxu0 0.0
  %1019 = vmatprep.subr.mxu0 0.0
  %1020 = vmatpush1.msra.mxu0 0.0
  %1021 = vmatprep.subr.mxu0 0.0
  %1022 = vmatpush1.msra.mxu0 0.0
  %1023 = vmatprep.subr.mxu0 0.0
  %1024 = vmatpush1.msra.mxu0 0.0
  %1025 = vmatprep.subr.mxu0 0.0
  %1026 = vmatpush1.msra.mxu0 0.0
  %1027 = vmatprep.subr.mxu0 0.0
  %1028 = vmatpush1.msra.mxu0 0.0
  %1029 = vmatprep.subr.mxu0 0.0
  %1030 = vmatpush1.msra.mxu0 0.0
  %1031 = vmatprep.subr.mxu0 0.0
  %1032 = vmatpush1.msra.mxu0 0.0
  %1033 = vmatprep.subr.mxu0 0.0
  %1034 = vmatpush1.msra.mxu0 0.0
  %1035 = vmatprep.subr.mxu0 0.0
  %1036 = vmatpush1.msra.mxu0 0.0
  %1037 = vmatprep.subr.mxu0 0.0
  %1038 = vmatpush1.msra.mxu0 0.0
  %1039 = vmatprep.subr.mxu0 0.0
  %1040 = vmatpush1.msra.mxu0 0.0
  %1041 = vmatprep.subr.mxu0 0.0
  %1042 = vmatpush1.msra.mxu0 0.0
  %1043 = vmatprep.subr.mxu0 0.0
  %1044 = vmatpush1.msra.mxu0 0.0
  %1045 = vmatprep.subr.mxu0 0.0
  %1046 = vmatpush1.msra.mxu0 0.0
  %1047 = vmatprep.subr.mxu0 0.0
  %1048 = vmatpush1.msra.mxu0 0.0
  %1049 = vmatprep.subr.mxu0 0.0
  %1050 = vmatpush1.msra.mxu0 0.0
  %1051 = vmatprep.subr.mxu0 0.0
  %1052 = vmatpush1.msra.mxu0 0.0
  %1053 = vmatprep.mubr.f32.mxu0 0.0
  %1054 = vmatmul.mubr.f32.gmra.mrb[0].mxu0 %v984
  %v1055 = vpop.f32.mrb[0].mxu0
  %v1056 = vadd.f32 0.0, %v1055
  %v1057 = vpop.f32.mrb[0].mxu0
  %1058 = vmatprep.mubr.f32.mxu0 0.0
  %1059 = vmatmul.mubr.f32.gmra.mrb[0].mxu0 %v987
  %v1060 = vpop.f32.mrb[0].mxu0
  %v1061 = vadd.f32 0.0, %v1060
  %v1062 = vpop.f32.mrb[0].mxu0
  %1063 = vdwg.mxu0
  %v1064 = vld [vmem:[%s7 + $0x10] sm:$0xff]
  %v1066 = vsel %vm230, %v1056, 0
  %v1069 = vsel %vm230, %v1061, 0
  %1071 = vmatprep.subr.mxu0 0.0
  %1072 = vmatpush1.msra.mxu0 %v1064
  %1073 = vmatprep.subr.mxu0 0.0
  %1074 = vmatpush1.msra.mxu0 0.0
  %1075 = vmatprep.subr.mxu0 0.0
  %1076 = vmatpush1.msra.mxu0 0.0
  %1077 = vmatprep.subr.mxu0 0.0
  %1078 = vmatpush1.msra.mxu0 0.0
  %1079 = vmatprep.subr.mxu0 0.0
  %1080 = vmatpush1.msra.mxu0 0.0
  %1081 = vmatprep.subr.mxu0 0.0
  %1082 = vmatpush1.msra.mxu0 0.0
  %1083 = vmatprep.subr.mxu0 0.0
  %1084 = vmatpush1.msra.mxu0 0.0
  %1085 = vmatprep.subr.mxu0 0.0
  %1086 = vmatpush1.msra.mxu0 0.0
  %1087 = vmatprep.subr.mxu0 0.0
  %1088 = vmatpush1.msra.mxu0 0.0
  %1089 = vmatprep.subr.mxu0 0.0
  %1090 = vmatpush1.msra.mxu0 0.0
  %1091 = vmatprep.subr.mxu0 0.0
  %1092 = vmatpush1.msra.mxu0 0.0
  %1093 = vmatprep.subr.mxu0 0.0
  %1094 = vmatpush1.msra.mxu0 0.0
  %1095 = vmatprep.subr.mxu0 0.0
  %1096 = vmatpush1.msra.mxu0 0.0
  %1097 = vmatprep.subr.mxu0 0.0
  %1098 = vmatpush1.msra.mxu0 0.0
  %1099 = vmatprep.subr.mxu0 0.0
  %1100 = vmatpush1.msra.mxu0 0.0
  %1101 = vmatprep.subr.mxu0 0.0
  %1102 = vmatpush1.msra.mxu0 0.0
  %1103 = vmatprep.subr.mxu0 0.0
  %1104 = vmatpush1.msra.mxu0 0.0
  %1105 = vmatprep.subr.mxu0 0.0
  %1106 = vmatpush1.msra.mxu0 0.0
  %1107 = vmatprep.subr.mxu0 0.0
  %1108 = vmatpush1.msra.mxu0 0.0
  %1109 = vmatprep.subr.mxu0 0.0
  %1110 = vmatpush1.msra.mxu0 0.0
  %1111 = vmatprep.subr.mxu0 0.0
  %1112 = vmatpush1.msra.mxu0 0.0
  %1113 = vmatprep.subr.mxu0 0.0
  %1114 = vmatpush1.msra.mxu0 0.0
  %1115 = vmatprep.subr.mxu0 0.0
  %1116 = vmatpush1.msra.mxu0 0.0
  %1117 = vmatprep.subr.mxu0 0.0
  %1118 = vmatpush1.msra.mxu0 0.0
  %1119 = vmatprep.subr.mxu0 0.0
  %1120 = vmatpush1.msra.mxu0 0.0
  %1121 = vmatprep.subr.mxu0 0.0
  %1122 = vmatpush1.msra.mxu0 0.0
  %1123 = vmatprep.subr.mxu0 0.0
  %1124 = vmatpush1.msra.mxu0 0.0
  %1125 = vmatprep.subr.mxu0 0.0
  %1126 = vmatpush1.msra.mxu0 0.0
  %1127 = vmatprep.subr.mxu0 0.0
  %1128 = vmatpush1.msra.mxu0 0.0
  %1129 = vmatprep.subr.mxu0 0.0
  %1130 = vmatpush1.msra.mxu0 0.0
  %1131 = vmatprep.subr.mxu0 0.0
  %1132 = vmatpush1.msra.mxu0 0.0
  %1133 = vmatprep.subr.mxu0 0.0
  %1134 = vmatpush1.msra.mxu0 0.0
  %1135 = vmatprep.mubr.f32.mxu0 0.0
  %1136 = vmatmul.mubr.f32.gmra.mrb[0].mxu0 %v1066
  %v1137 = vpop.f32.mrb[0].mxu0
  %v1138 = vadd.f32 0.0, %v1137
  %v1139 = vpop.f32.mrb[0].mxu0
  %1140 = vmatprep.mubr.f32.mxu0 0.0
  %1141 = vmatmul.mubr.f32.gmra.mrb[0].mxu0 %v1069
  %v1142 = vpop.f32.mrb[0].mxu0
  %v1143 = vadd.f32 0.0, %v1142
  %v1144 = vpop.f32.mrb[0].mxu0
  %1145 = vdwg.mxu0
  %v1146 = vadd.f32 %v838, %v1138
  %v1147 = vadd.f32 %v839, %v1143
  %1148 = vrot.lane.b32.xlu0 %v121, 104
  %v1149 = vpop.permute.xlu0 %1148
  %1150 = vrot.lane.b32.xlu0 %v126, 104
  %v1151 = vpop.permute.xlu0 %1150
  %1152 = vrot.lane.b32.xlu0 %v121, 72
  %v1153 = vpop.permute.xlu0 %1152
  %1154 = vrot.lane.b32.xlu0 %v126, 72
  %v1155 = vpop.permute.xlu0 %1154
  %v1156 = vsel %vm230, %v1149, 0
  %v1158 = vsel %vm230, %v1151, 0
  %v1160 = vsel %vm230, %v1153, 0
  %v1162 = vsel %vm230, %v1155, 0
  %1164 = vmatprep.subr.mxu0 0.0
  %1165 = vmatpush1.xpose.msra.mxu0 %v1160
  %1166 = vmatprep.subr.mxu0 0.0
  %1167 = vmatpush1.xpose.msra.mxu0 %v1162
  %1168 = vmatprep.subr.mxu0 0.0
  %1169 = vmatpush1.xpose.msra.mxu0 0.0
  %1170 = vmatprep.subr.mxu0 0.0
  %1171 = vmatpush1.xpose.msra.mxu0 0.0
  %1172 = vmatprep.subr.mxu0 0.0
  %1173 = vmatpush1.xpose.msra.mxu0 0.0
  %1174 = vmatprep.subr.mxu0 0.0
  %1175 = vmatpush1.xpose.msra.mxu0 0.0
  %1176 = vmatprep.subr.mxu0 0.0
  %1177 = vmatpush1.xpose.msra.mxu0 0.0
  %1178 = vmatprep.subr.mxu0 0.0
  %1179 = vmatpush1.xpose.msra.mxu0 0.0
  %1180 = vmatprep.subr.mxu0 0.0
  %1181 = vmatpush1.xpose.msra.mxu0 0.0
  %1182 = vmatprep.subr.mxu0 0.0
  %1183 = vmatpush1.xpose.msra.mxu0 0.0
  %1184 = vmatprep.subr.mxu0 0.0
  %1185 = vmatpush1.xpose.msra.mxu0 0.0
  %1186 = vmatprep.subr.mxu0 0.0
  %1187 = vmatpush1.xpose.msra.mxu0 0.0
  %1188 = vmatprep.subr.mxu0 0.0
  %1189 = vmatpush1.xpose.msra.mxu0 0.0
  %1190 = vmatprep.subr.mxu0 0.0
  %1191 = vmatpush1.xpose.msra.mxu0 0.0
  %1192 = vmatprep.subr.mxu0 0.0
  %1193 = vmatpush1.xpose.msra.mxu0 0.0
  %1194 = vmatprep.subr.mxu0 0.0
  %1195 = vmatpush1.xpose.msra.mxu0 0.0
  %1196 = vmatprep.subr.mxu0 0.0
  %1197 = vmatpush1.xpose.msra.mxu0 0.0
  %1198 = vmatprep.subr.mxu0 0.0
  %1199 = vmatpush1.xpose.msra.mxu0 0.0
  %1200 = vmatprep.subr.mxu0 0.0
  %1201 = vmatpush1.xpose.msra.mxu0 0.0
  %1202 = vmatprep.subr.mxu0 0.0
  %1203 = vmatpush1.xpose.msra.mxu0 0.0
  %1204 = vmatprep.subr.mxu0 0.0
  %1205 = vmatpush1.xpose.msra.mxu0 0.0
  %1206 = vmatprep.subr.mxu0 0.0
  %1207 = vmatpush1.xpose.msra.mxu0 0.0
  %1208 = vmatprep.subr.mxu0 0.0
  %1209 = vmatpush1.xpose.msra.mxu0 0.0
  %1210 = vmatprep.subr.mxu0 0.0
  %1211 = vmatpush1.xpose.msra.mxu0 0.0
  %1212 = vmatprep.subr.mxu0 0.0
  %1213 = vmatpush1.xpose.msra.mxu0 0.0
  %1214 = vmatprep.subr.mxu0 0.0
  %1215 = vmatpush1.xpose.msra.mxu0 0.0
  %1216 = vmatprep.subr.mxu0 0.0
  %1217 = vmatpush1.xpose.msra.mxu0 0.0
  %1218 = vmatprep.subr.mxu0 0.0
  %1219 = vmatpush1.xpose.msra.mxu0 0.0
  %1220 = vmatprep.subr.mxu0 0.0
  %1221 = vmatpush1.xpose.msra.mxu0 0.0
  %1222 = vmatprep.subr.mxu0 0.0
  %1223 = vmatpush1.xpose.msra.mxu0 0.0
  %1224 = vmatprep.subr.mxu0 0.0
  %1225 = vmatpush1.xpose.msra.mxu0 0.0
  %1226 = vmatprep.subr.mxu0 0.0
  %1227 = vmatpush1.xpose.msra.mxu0 0.0
  %1228 = vmatprep.mubr.f32.mxu0 0.0
  %1229 = vmatmul.mubr.f32.gmra.mrb[0].mxu0 %v1156
  %v1230 = vpop.f32.mrb[0].mxu0
  %v1231 = vadd.f32 0.0, %v1230
  %v1232 = vpop.f32.mrb[0].mxu0
  %1233 = vmatprep.mubr.f32.mxu0 0.0
  %1234 = vmatmul.mubr.f32.gmra.mrb[0].mxu0 %v1158
  %v1235 = vpop.f32.mrb[0].mxu0
  %v1236 = vadd.f32 0.0, %v1235
  %v1237 = vpop.f32.mrb[0].mxu0
  %1238 = vdwg.mxu0
  %v1239 = vmul.f32 %v1231, 0.35355338
  %v1240 = vmul.f32 %v1236, 0.35355338
  %v1241 = vadd.f32 %v1239, %v222
  %v1242 = vadd.f32 %v1240, %v223
  %v1243 = vsel %vm318, %v1241, -inf
  %1244 = vmax.xlane.f32.xlu0 %v1243
  %v1245 = vpop.xlane.xlu0 %1244
  %v1246 = vsel %vm318, %v1242, -inf
  %1247 = vmax.xlane.f32.xlu0 %v1246
  %v1248 = vpop.xlane.xlu0 %1247
  %v1249 = vsub.f32 %v1241, %v1245
  %v1250 = vsub.f32 %v1242, %v1248
  %v1251 = vmul.f32 %v1249, 1.442695
  %v1252 = vpow.pop %v1251
  %v1253 = vmul.f32 %v1250, 1.442695
  %v1254 = vpow.pop %v1253
  %v1255 = vsel %vm318, %v1252, 0.0
  %1256 = vadd.xlane.f32.xlu0 %v1255
  %v1257 = vpop.xlane.xlu0 %1256
  %v1258 = vsel %vm318, %v1254, 0.0
  %1259 = vadd.xlane.f32.xlu0 %v1258
  %v1260 = vpop.xlane.xlu0 %1259
  %v1261 = vrcp.pop %v1257
  %v1262 = vmul.f32 %v1252, %v1261
  %v1263 = vrcp.pop %v1260
  %v1264 = vmul.f32 %v1254, %v1263
  %1265 = vset.pattern.permute.xlu0 99
  %1266 = vperm.xlu0 %1265, %v121
  %v1267 = vpop.permute.xlu0 %1266
  %1269 = vset.pattern.permute.xlu0 99
  %1270 = vperm.xlu0 %1269, %v126
  %v1271 = vpop.permute.xlu0 %1270
  %v1273 = vlaneseq
  %v1274 = vshrl.u32 %v1273, 7
  %v1275 = vsub.s32 3, %v1274
  %v1276 = vrot.slane %v219, %v1275
  %v1277 = vmul.f32 %v1267, %v1276
  %v1278 = vmul.f32 %v1271, %v1276
  %v1279 = vmax.f32 %v1277, 0.0
  %v1280 = vmax.f32 %v1278, 0.0
  %v1281 = vmin.f32 %v1279, 1.0
  %v1282 = vmin.f32 %v1280, 1.0
  %v1283 = vmul.f32 %v1281, %v1262
  %v1284 = vmul.f32 %v1282, %v1264
  %1285 = vrot.lane.b32.xlu0 %v121, 40
  %v1286 = vpop.permute.xlu0 %1285
  %1287 = vrot.lane.b32.xlu0 %v126, 40
  %v1288 = vpop.permute.xlu0 %1287
  %v1292 = vsel %vm318, %v1283, 0
  %v1295 = vsel %vm318, %v1284, 0
  %1297 = vmatprep.subr.mxu0 0.0
  %1298 = vmatpush1.msra.mxu0 %v1286
  %1299 = vmatprep.subr.mxu0 0.0
  %1300 = vmatpush1.msra.mxu0 %v1288
  %1301 = vmatprep.subr.mxu0 0.0
  %1302 = vmatpush1.msra.mxu0 0.0
  %1303 = vmatprep.subr.mxu0 0.0
  %1304 = vmatpush1.msra.mxu0 0.0
  %1305 = vmatprep.subr.mxu0 0.0
  %1306 = vmatpush1.msra.mxu0 0.0
  %1307 = vmatprep.subr.mxu0 0.0
  %1308 = vmatpush1.msra.mxu0 0.0
  %1309 = vmatprep.subr.mxu0 0.0
  %1310 = vmatpush1.msra.mxu0 0.0
  %1311 = vmatprep.subr.mxu0 0.0
  %1312 = vmatpush1.msra.mxu0 0.0
  %1313 = vmatprep.subr.mxu0 0.0
  %1314 = vmatpush1.msra.mxu0 0.0
  %1315 = vmatprep.subr.mxu0 0.0
  %1316 = vmatpush1.msra.mxu0 0.0
  %1317 = vmatprep.subr.mxu0 0.0
  %1318 = vmatpush1.msra.mxu0 0.0
  %1319 = vmatprep.subr.mxu0 0.0
  %1320 = vmatpush1.msra.mxu0 0.0
  %1321 = vmatprep.subr.mxu0 0.0
  %1322 = vmatpush1.msra.mxu0 0.0
  %1323 = vmatprep.subr.mxu0 0.0
  %1324 = vmatpush1.msra.mxu0 0.0
  %1325 = vmatprep.subr.mxu0 0.0
  %1326 = vmatpush1.msra.mxu0 0.0
  %1327 = vmatprep.subr.mxu0 0.0
  %1328 = vmatpush1.msra.mxu0 0.0
  %1329 = vmatprep.subr.mxu0 0.0
  %1330 = vmatpush1.msra.mxu0 0.0
  %1331 = vmatprep.subr.mxu0 0.0
  %1332 = vmatpush1.msra.mxu0 0.0
  %1333 = vmatprep.subr.mxu0 0.0
  %1334 = vmatpush1.msra.mxu0 0.0
  %1335 = vmatprep.subr.mxu0 0.0
  %1336 = vmatpush1.msra.mxu0 0.0
  %1337 = vmatprep.subr.mxu0 0.0
  %1338 = vmatpush1.msra.mxu0 0.0
  %1339 = vmatprep.subr.mxu0 0.0
  %1340 = vmatpush1.msra.mxu0 0.0
  %1341 = vmatprep.subr.mxu0 0.0
  %1342 = vmatpush1.msra.mxu0 0.0
  %1343 = vmatprep.subr.mxu0 0.0
  %1344 = vmatpush1.msra.mxu0 0.0
  %1345 = vmatprep.subr.mxu0 0.0
  %1346 = vmatpush1.msra.mxu0 0.0
  %1347 = vmatprep.subr.mxu0 0.0
  %1348 = vmatpush1.msra.mxu0 0.0
  %1349 = vmatprep.subr.mxu0 0.0
  %1350 = vmatpush1.msra.mxu0 0.0
  %1351 = vmatprep.subr.mxu0 0.0
  %1352 = vmatpush1.msra.mxu0 0.0
  %1353 = vmatprep.subr.mxu0 0.0
  %1354 = vmatpush1.msra.mxu0 0.0
  %1355 = vmatprep.subr.mxu0 0.0
  %1356 = vmatpush1.msra.mxu0 0.0
  %1357 = vmatprep.subr.mxu0 0.0
  %1358 = vmatpush1.msra.mxu0 0.0
  %1359 = vmatprep.subr.mxu0 0.0
  %1360 = vmatpush1.msra.mxu0 0.0
  %1361 = vmatprep.mubr.f32.mxu0 0.0
  %1362 = vmatmul.mubr.f32.gmra.mrb[0].mxu0 %v1292
  %v1363 = vpop.f32.mrb[0].mxu0
  %v1364 = vadd.f32 0.0, %v1363
  %v1365 = vpop.f32.mrb[0].mxu0
  %1366 = vmatprep.mubr.f32.mxu0 0.0
  %1367 = vmatmul.mubr.f32.gmra.mrb[0].mxu0 %v1295
  %v1368 = vpop.f32.mrb[0].mxu0
  %v1369 = vadd.f32 0.0, %v1368
  %v1370 = vpop.f32.mrb[0].mxu0
  %1371 = vdwg.mxu0
  %v1372 = vld [vmem:[%s7 + $0x18] sm:$0xff]
  %v1374 = vsel %vm230, %v1364, 0
  %v1377 = vsel %vm230, %v1369, 0
  %1379 = vmatprep.subr.mxu0 0.0
  %1380 = vmatpush1.msra.mxu0 %v1372
  %1381 = vmatprep.subr.mxu0 0.0
  %1382 = vmatpush1.msra.mxu0 0.0
  %1383 = vmatprep.subr.mxu0 0.0
  %1384 = vmatpush1.msra.mxu0 0.0
  %1385 = vmatprep.subr.mxu0 0.0
  %1386 = vmatpush1.msra.mxu0 0.0
  %1387 = vmatprep.subr.mxu0 0.0
  %1388 = vmatpush1.msra.mxu0 0.0
  %1389 = vmatprep.subr.mxu0 0.0
  %1390 = vmatpush1.msra.mxu0 0.0
  %1391 = vmatprep.subr.mxu0 0.0
  %1392 = vmatpush1.msra.mxu0 0.0
  %1393 = vmatprep.subr.mxu0 0.0
  %1394 = vmatpush1.msra.mxu0 0.0
  %1395 = vmatprep.subr.mxu0 0.0
  %1396 = vmatpush1.msra.mxu0 0.0
  %1397 = vmatprep.subr.mxu0 0.0
  %1398 = vmatpush1.msra.mxu0 0.0
  %1399 = vmatprep.subr.mxu0 0.0
  %1400 = vmatpush1.msra.mxu0 0.0
  %1401 = vmatprep.subr.mxu0 0.0
  %1402 = vmatpush1.msra.mxu0 0.0
  %1403 = vmatprep.subr.mxu0 0.0
  %1404 = vmatpush1.msra.mxu0 0.0
  %1405 = vmatprep.subr.mxu0 0.0
  %1406 = vmatpush1.msra.mxu0 0.0
  %1407 = vmatprep.subr.mxu0 0.0
  %1408 = vmatpush1.msra.mxu0 0.0
  %1409 = vmatprep.subr.mxu0 0.0
  %1410 = vmatpush1.msra.mxu0 0.0
  %1411 = vmatprep.subr.mxu0 0.0
  %1412 = vmatpush1.msra.mxu0 0.0
  %1413 = vmatprep.subr.mxu0 0.0
  %1414 = vmatpush1.msra.mxu0 0.0
  %1415 = vmatprep.subr.mxu0 0.0
  %1416 = vmatpush1.msra.mxu0 0.0
  %1417 = vmatprep.subr.mxu0 0.0
  %1418 = vmatpush1.msra.mxu0 0.0
  %1419 = vmatprep.subr.mxu0 0.0
  %1420 = vmatpush1.msra.mxu0 0.0
  %1421 = vmatprep.subr.mxu0 0.0
  %1422 = vmatpush1.msra.mxu0 0.0
  %1423 = vmatprep.subr.mxu0 0.0
  %1424 = vmatpush1.msra.mxu0 0.0
  %1425 = vmatprep.subr.mxu0 0.0
  %1426 = vmatpush1.msra.mxu0 0.0
  %1427 = vmatprep.subr.mxu0 0.0
  %1428 = vmatpush1.msra.mxu0 0.0
  %1429 = vmatprep.subr.mxu0 0.0
  %1430 = vmatpush1.msra.mxu0 0.0
  %1431 = vmatprep.subr.mxu0 0.0
  %1432 = vmatpush1.msra.mxu0 0.0
  %1433 = vmatprep.subr.mxu0 0.0
  %1434 = vmatpush1.msra.mxu0 0.0
  %1435 = vmatprep.subr.mxu0 0.0
  %1436 = vmatpush1.msra.mxu0 0.0
  %1437 = vmatprep.subr.mxu0 0.0
  %1438 = vmatpush1.msra.mxu0 0.0
  %1439 = vmatprep.subr.mxu0 0.0
  %1440 = vmatpush1.msra.mxu0 0.0
  %1441 = vmatprep.subr.mxu0 0.0
  %1442 = vmatpush1.msra.mxu0 0.0
  %1443 = vmatprep.mubr.f32.mxu0 0.0
  %1444 = vmatmul.mubr.f32.gmra.mrb[0].mxu0 %v1374
  %v1445 = vpop.f32.mrb[0].mxu0
  %v1446 = vadd.f32 0.0, %v1445
  %v1447 = vpop.f32.mrb[0].mxu0
  %1448 = vmatprep.mubr.f32.mxu0 0.0
  %1449 = vmatmul.mubr.f32.gmra.mrb[0].mxu0 %v1377
  %v1450 = vpop.f32.mrb[0].mxu0
  %v1451 = vadd.f32 0.0, %v1450
  %v1452 = vpop.f32.mrb[0].mxu0
  %1453 = vdwg.mxu0
  %v1454 = vadd.f32 %v1146, %v1446
  %v1455 = vadd.f32 %v1147, %v1451
  %1456 = vst [vmem:[%s8] sm:$0xff] %v1454
  %1457 = vst [vmem:[%s8 + $0x8] sm:$0xff] %v1455
  // Predicated region
  $region34: #{modified_attention_transformer.2} parent=0 // pred_check
    _
  $region35: #{modified_attention_transformer.2} parent=0 // pred_check_branch
    %1459 = sbr.rel (0) target = $region37
  $region36: #{modified_attention_transformer.2} parent=0 // pred_region
    _
  $region37: #{modified_attention_transformer.2} parent=0 // pred_fallthru
    _
  // Predicated region
  $region38: #{modified_attention_transformer.2} parent=0 // pred_check
    _
  $region39: #{modified_attention_transformer.2} parent=0 // pred_check_branch
    %1461 = sbr.rel (0) target = $region41
  $region40: #{modified_attention_transformer.2} parent=0 // pred_region
    _
  $region41: #{modified_attention_transformer.2} parent=0 // pred_fallthru
    _

</llo_original>
